<compile_context>
chip_gen: v7x
topology: tpu7x:2x2x1
jax: 0.10.0
libtpu: 0.0.40
codegen_flags: <defaults>
</compile_context>

<pallas_src>
import numpy as np
import jax
import jax.numpy as jnp
from jax.experimental import pallas as pl
from jax.experimental.pallas import tpu as pltpu


# ----------------------------- model config ---------------------------------
B = 2          # batch
C = 4          # input channels
IMG = 16       # image height/width
PS = 4         # patch size
P = (IMG // PS) * (IMG // PS)   # 16 patches
PD = PS * PS * C                # 64 patch dim
D = 32                          # mixer hidden dim
DEPTH = 2                       # mixer layers
HT = P * 4                      # token-mix hidden (expansion_factor=4)
HC = D // 2                     # channel-mix hidden (expansion_factor_token=0.5)
NC = 10                         # num classes
LN_EPS = 1e-5                   # PyTorch LayerNorm default
LANES = 128                     # parameter-buffer lane width


# --------------------------- packed-parameter layout --------------------------
def _round8(n):
    return ((n + 7) // 8) * 8


def _build_layout():
    """Static (row_start, n_rows, n_cols) of every slab in the single
    lane-dense [rows, 128] parameter buffer.  All slabs start at lane 0 and on
    an 8-sublane boundary, so every in-kernel access is an aligned static
    slice."""
    specs = [("w_emb_blk", B * PD, B * D),   # block-diag patch embed
             ("b_emb", P, B * D),            # pre-broadcast embed bias
             ("m_avg", B * D, B * D)]        # per-D-block averaging matrix
    for l in range(DEPTH):
        specs += [
            (f"g1_{l}",  P, B * D),          # ln1 gamma, pre-broadcast
            (f"wt1_{l}", HT, P),             # token-mix in
            (f"bt1_{l}", HT, B * D),         # bt1 + rowsum(wt1)*ln1_beta
            (f"wt2_{l}", P, HT),             # token-mix out
            (f"bt2_{l}", P, B * D),          # bt2 pre-broadcast
            (f"wc1_{l}", B * D, B * HC),     # blockdiag(diag(ln2_g) @ wc1)
            (f"bc1_{l}", P, B * HC),         # bc1 + ln2_b @ wc1, pre-broadcast
            (f"wc2_{l}", B * HC, B * D),     # blockdiag(wc2)
            (f"bc2_{l}", P, B * D),          # bc2 pre-broadcast
        ]
    specs += [("avg_pool", 8, P),            # mean-pool matrix (all rows 1/P)
              ("w_head", B * D, LANES),      # blockdiag(diag(lnf_g) @ w_head)
              ("b_head", 8, LANES)]          # b_head + lnf_b @ w_head, bcast
    layout, row = {}, 0
    for name, nr, nc in specs:
        layout[name] = (row, nr, nc)
        row += _round8(nr)
    return layout, row


_LAYOUT, _PROWS = _build_layout()


# ------------------------------ in-kernel math --------------------------------
def _gelu(x):
    # Exact (erf) GELU, matching torch.nn.GELU() default.
    return 0.5 * x * (1.0 + jax.lax.erf(x / jnp.sqrt(2.0).astype(x.dtype)))


def mixer_kernel(xp_ref, p_ref, out_ref):
    # xp_ref : [P, B*PD]    patch tokens, batch stacked along lanes
    # p_ref  : [_PROWS, 128] packed parameters (built once, offline)
    # out_ref: [8, 128]      logits slab; batch b in lanes b*64 .. b*64+NC-1

    def get(name):
        r, nr, nc = _LAYOUT[name]
        return p_ref[r:r + nr, :nc]          # aligned static slice

    mavg = get("m_avg")                      # hoisted: shared by all LayerNorms

    def norm_only(x):
        # bare LayerNorm over each per-batch D-block of lanes; stats computed
        # with a block-averaging matmul (results already lane-broadcast).
        mean = jnp.dot(x, mavg, preferred_element_type=jnp.float32)
        meansq = jnp.dot(x * x, mavg, preferred_element_type=jnp.float32)
        return (x - mean) * jax.lax.rsqrt(meansq - mean * mean + LN_EPS)

    # Patch embedding (block-diagonal): [P, B*PD] @ [B*PD, B*D] -> [P, B*D]
    x = jnp.dot(xp_ref[...], get("w_emb_blk"),
                preferred_element_type=jnp.float32) + get("b_emb")

    for l in range(DEPTH):
        # ---- PreNormResidual( token-mixing MLP over the patch axis ) ----
        y = norm_only(x) * get(f"g1_{l}")                           # [P, B*D]
        h = jnp.dot(get(f"wt1_{l}"), y,
                    preferred_element_type=jnp.float32) + get(f"bt1_{l}")  # [HT, B*D]
        h = _gelu(h)
        x = x + jnp.dot(get(f"wt2_{l}"), h,
                        preferred_element_type=jnp.float32) + get(f"bt2_{l}")

        # ---- PreNormResidual( channel-mixing MLP over the feature axis ) ----
        y = norm_only(x)                                            # ln2 affine folded
        h = _gelu(jnp.dot(y, get(f"wc1_{l}"),
                          preferred_element_type=jnp.float32) + get(f"bc1_{l}"))
        x = x + jnp.dot(h, get(f"wc2_{l}"),
                        preferred_element_type=jnp.float32) + get(f"bc2_{l}")

    # Final LayerNorm (affine folded into head), mean pool via matmul, head.
    y = norm_only(x)                                                # [P, B*D]
    pooled = jnp.dot(get("avg_pool"), y,
                     preferred_element_type=jnp.float32)            # [8, B*D]
    out_ref[...] = jnp.dot(pooled, get("w_head"),
                           preferred_element_type=jnp.float32) + get("b_head")


# --------------------------------- wrapper ------------------------------------
def _patchify(x):
    # 'b c (h p1) (w p2) -> b (h w) (p1 p2 c)'
    b, c, h, w = x.shape
    hh, ww = h // PS, w // PS
    x = x.reshape(b, c, hh, PS, ww, PS)
    x = jnp.transpose(x, (0, 2, 4, 3, 5, 1))        # b, h, w, p1, p2, c
    return x.reshape(b, hh * ww, PS * PS * c)


def pack_params(p):
    """Build the lane-dense [_PROWS, 128] parameter buffer ONCE (numpy, on the
    host) with all bias / LayerNorm-affine folds and block-diagonal weights
    precomputed.  Returns a device-resident jnp array."""
    pn = {k: np.asarray(v, np.float32) for k, v in p.items()}
    buf = np.zeros((_PROWS, LANES), np.float32)

    def put(name, arr):
        r, nr, nc = _LAYOUT[name]
        buf[r:r + nr, :nc] = np.asarray(arr, np.float32).reshape(nr, nc)

    def blockdiag(w, n):
        r, c = w.shape
        out = np.zeros((n * r, n * c), np.float32)
        for b in range(n):
            out[b * r:(b + 1) * r, b * c:(b + 1) * c] = w
        return out

    # patch embedding
    put("w_emb_blk", blockdiag(pn["w_emb"], B))
    put("b_emb", np.broadcast_to(np.tile(pn["b_emb"].reshape(D), B), (P, B * D)))

    # block-averaging matrix for per-batch-block LayerNorm statistics
    put("m_avg", blockdiag(np.full((D, D), 1.0 / D, np.float32), B))

    for l in range(DEPTH):
        g1, b1 = pn["ln1_g"][l], pn["ln1_b"][l]
        wt1, bt1 = pn["wt1"][l], pn["bt1"][l].reshape(HT)
        wt2, bt2 = pn["wt2"][l], pn["bt2"][l].reshape(P)
        g2, b2 = pn["ln2_g"][l], pn["ln2_b"][l]
        wc1, bc1 = pn["wc1"][l], pn["bc1"][l].reshape(HC)
        wc2, bc2 = pn["wc2"][l], pn["bc2"][l].reshape(D)

        g1_tile = np.tile(g1, B)
        b1_tile = np.tile(b1, B)
        put(f"g1_{l}", np.broadcast_to(g1_tile, (P, B * D)))
        put(f"wt1_{l}", wt1)
        # fold ln1 beta into the token-mix bias: wt1 @ (1 * beta) = rowsum*beta
        bt1f = bt1[:, None] + wt1.sum(axis=1, keepdims=True) * b1_tile[None, :]
        put(f"bt1_{l}", bt1f)
        put(f"wt2_{l}", wt2)
        put(f"bt2_{l}", np.broadcast_to(bt2[:, None], (P, B * D)))

        # fold ln2 affine into channel-mix first linear
        put(f"wc1_{l}", blockdiag(g2[:, None] * wc1, B))
        bc1f = bc1 + b2 @ wc1
        put(f"bc1_{l}", np.broadcast_to(np.tile(bc1f, B), (P, B * HC)))
        put(f"wc2_{l}", blockdiag(wc2, B))
        put(f"bc2_{l}", np.broadcast_to(np.tile(bc2, B), (P, B * D)))

    # pooling + head (final LayerNorm affine folded into the head)
    put("avg_pool", np.full((8, P), 1.0 / P, np.float32))
    gf, bf = pn["lnf_g"].reshape(D), pn["lnf_b"].reshape(D)
    wh, bh = pn["w_head"], pn["b_head"].reshape(NC)
    whp = gf[:, None] * wh                      # [D, NC]
    bhf = bh + bf @ wh                          # [NC]
    whb = np.zeros((B * D, LANES), np.float32)
    bhb = np.zeros((LANES,), np.float32)
    for b in range(B):
        whb[b * D:(b + 1) * D, b * 64:b * 64 + NC] = whp
        bhb[b * 64:b * 64 + NC] = bhf
    put("w_head", whb)
    put("b_head", np.broadcast_to(bhb, (8, LANES)))
    return jnp.asarray(buf)


def mlp_mixer_forward(x, pbuf):
    # per-call path: patchify to lane-stacked tokens, one pallas_call, slice.
    xp = _patchify(x).astype(jnp.float32)                         # [B, P, PD]
    xp_lane = jnp.transpose(xp, (1, 0, 2)).reshape(P, B * PD)     # [16, 128]

    out = pl.pallas_call(
        mixer_kernel,
        out_shape=jax.ShapeDtypeStruct((8, LANES), jnp.float32),
        grid=(1,),
        in_specs=[pl.BlockSpec((P, B * PD), lambda i: (0, 0)),
                  pl.BlockSpec((_PROWS, LANES), lambda i: (0, 0))],
        out_specs=pl.BlockSpec((8, LANES), lambda i: (0, 0)),
        compiler_params=pltpu.CompilerParams(
            dimension_semantics=("arbitrary",)),
    )(xp_lane, pbuf)
    return out[0].reshape(B, LANES // B)[:, :NC]


# --------------------------- pure-JAX reference -------------------------------
def _layernorm(x, g, b):
    mean = jnp.mean(x, axis=-1, keepdims=True)
    var = jnp.mean((x - mean) ** 2, axis=-1, keepdims=True)
    return (x - mean) * jax.lax.rsqrt(var + LN_EPS) * g + b


def _reference(x, p):
    xp = _patchify(x).astype(jnp.float32)            # [B, P, PD]

    def single(tokens):
        h = tokens @ p["w_emb"] + p["b_emb"]
        for l in range(DEPTH):
            y = _layernorm(h, p["ln1_g"][l:l + 1], p["ln1_b"][l:l + 1])
            t = _gelu(p["wt1"][l] @ y + p["bt1"][l])
            h = h + (p["wt2"][l] @ t + p["bt2"][l])
            y = _layernorm(h, p["ln2_g"][l:l + 1], p["ln2_b"][l:l + 1])
            t = _gelu(y @ p["wc1"][l] + p["bc1"][l])
            h = h + (t @ p["wc2"][l] + p["bc2"][l])
        h = _layernorm(h, p["lnf_g"], p["lnf_b"])
        pooled = jnp.mean(h, axis=0, keepdims=True)
        return (pooled @ p["w_head"] + p["b_head"])[0]

    return jax.vmap(single)(xp)


# ------------------------------ param init ------------------------------------
def init_params(key):
    keys = jax.random.split(key, 16)

    def rnd(k, shape, fan_in):
        return jax.random.normal(k, shape, jnp.float32) / jnp.sqrt(fan_in)

    return {
        "w_emb": rnd(keys[0], (PD, D), PD),
        "b_emb": jnp.zeros((1, D), jnp.float32),
        "ln1_g": jnp.ones((DEPTH, D), jnp.float32),
        "ln1_b": jnp.zeros((DEPTH, D), jnp.float32),
        "wt1": rnd(keys[1], (DEPTH, HT, P), P),
        "bt1": 0.01 * jax.random.normal(keys[2], (DEPTH, HT, 1), jnp.float32),
        "wt2": rnd(keys[3], (DEPTH, P, HT), HT),
        "bt2": 0.01 * jax.random.normal(keys[4], (DEPTH, P, 1), jnp.float32),
        "ln2_g": jnp.ones((DEPTH, D), jnp.float32),
        "ln2_b": jnp.zeros((DEPTH, D), jnp.float32),
        "wc1": rnd(keys[5], (DEPTH, D, HC), D),
        "bc1": 0.01 * jax.random.normal(keys[6], (DEPTH, 1, HC), jnp.float32),
        "wc2": rnd(keys[7], (DEPTH, HC, D), HC),
        "bc2": 0.01 * jax.random.normal(keys[8], (DEPTH, 1, D), jnp.float32),
        "lnf_g": jnp.ones((1, D), jnp.float32),
        "lnf_b": jnp.zeros((1, D), jnp.float32),
        "w_head": rnd(keys[9], (D, NC), D),
        "b_head": jnp.zeros((1, NC), jnp.float32),
    }


# ---------------------------------- main ---------------------------------------
if __name__ == "__main__":
    key = jax.random.PRNGKey(0)
    k_x, k_p = jax.random.split(key)

    x = jax.random.normal(k_x, (B, C, IMG, IMG), jnp.float32)   # NCHW input
    params = init_params(k_p)

    # Built ONCE at init; stays resident on device across calls.
    pbuf = pack_params(params)

    fwd = jax.jit(mlp_mixer_forward)
    out = jax.block_until_ready(fwd(x, pbuf))

    ref = _reference(x, params)
    assert out.shape == (B, NC)
    assert jnp.all(jnp.isfinite(out))
    assert jnp.allclose(out, ref, atol=1e-3, rtol=1e-3), (out, ref)

    print("KERNEL_OK")
</pallas_src>

<mosaic_0001>
module attributes {stable_mosaic.version = 11 : i64} {
  func.func @mixer_kernel(%arg0: i32, %arg1: memref<16x128xf32, #tpu.memory_space<vmem>>, %arg2: memref<896x128xf32, #tpu.memory_space<vmem>>, %arg3: memref<8x128xf32, #tpu.memory_space<vmem>>) attributes {dimension_semantics = [#tpu.dimension_semantics<arbitrary>], iteration_bounds = array<i64: 1>, scalar_prefetch = 0 : i64, scratch_operands = 0 : i64, tpu.core_type = #tpu.core_type<tc>, window_params = [{pipeline_mode = #tpu.pipeline_mode<synchronous>, transform_indices = @transform_0, window_bounds = array<i64: 16, 128>}, {pipeline_mode = #tpu.pipeline_mode<synchronous>, transform_indices = @transform_1, window_bounds = array<i64: 896, 128>}, {pipeline_mode = #tpu.pipeline_mode<synchronous>, transform_indices = @transform_2, window_bounds = array<i64: 8, 128>}]} {
    %c144 = arith.constant 144 : index
    %c0 = arith.constant 0 : index
    %0 = vector.load %arg2[%c144, %c0] : memref<896x128xf32, #tpu.memory_space<vmem>>, vector<64x64xf32>
    %c0_0 = arith.constant 0 : index
    %c0_1 = arith.constant 0 : index
    %1 = vector.load %arg1[%c0_0, %c0_1] : memref<16x128xf32, #tpu.memory_space<vmem>>, vector<16x128xf32>
    %c0_2 = arith.constant 0 : index
    %c0_3 = arith.constant 0 : index
    %2 = vector.load %arg2[%c0_2, %c0_3] : memref<896x128xf32, #tpu.memory_space<vmem>>, vector<128x64xf32>
    %cst = arith.constant dense<0.000000e+00> : vector<16x64xf32>
    %3 = tpu.matmul %1, %2, %cst {dimension_numbers = #tpu.dot_dimension_numbers<[1], [0], [0], [1], [0, 0, 1, 1], [], []>} : vector<16x128xf32>, vector<128x64xf32>, vector<16x64xf32> -> vector<16x64xf32>
    %c128 = arith.constant 128 : index
    %c0_4 = arith.constant 0 : index
    %4 = vector.load %arg2[%c128, %c0_4] : memref<896x128xf32, #tpu.memory_space<vmem>>, vector<16x64xf32>
    %5 = arith.addf %3, %4 : vector<16x64xf32>
    %cst_5 = arith.constant dense<0.000000e+00> : vector<16x64xf32>
    %6 = tpu.matmul %5, %0, %cst_5 {dimension_numbers = #tpu.dot_dimension_numbers<[1], [0], [0], [1], [0, 0, 1, 1], [], []>} : vector<16x64xf32>, vector<64x64xf32>, vector<16x64xf32> -> vector<16x64xf32>
    %7 = arith.mulf %5, %5 : vector<16x64xf32>
    %cst_6 = arith.constant dense<0.000000e+00> : vector<16x64xf32>
    %8 = tpu.matmul %7, %0, %cst_6 {dimension_numbers = #tpu.dot_dimension_numbers<[1], [0], [0], [1], [0, 0, 1, 1], [], []>} : vector<16x64xf32>, vector<64x64xf32>, vector<16x64xf32> -> vector<16x64xf32>
    %9 = arith.subf %5, %6 : vector<16x64xf32>
    %10 = arith.mulf %6, %6 : vector<16x64xf32>
    %11 = arith.subf %8, %10 : vector<16x64xf32>
    %cst_7 = arith.constant 9.99999974E-6 : f32
    %12 = vector.broadcast %cst_7 : f32 to vector<16x64xf32>
    %13 = arith.addf %11, %12 : vector<16x64xf32>
    %14 = math.rsqrt %13 : vector<16x64xf32>
    %15 = arith.mulf %9, %14 : vector<16x64xf32>
    %c208 = arith.constant 208 : index
    %c0_8 = arith.constant 0 : index
    %16 = vector.load %arg2[%c208, %c0_8] : memref<896x128xf32, #tpu.memory_space<vmem>>, vector<16x64xf32>
    %17 = arith.mulf %15, %16 : vector<16x64xf32>
    %c224 = arith.constant 224 : index
    %c0_9 = arith.constant 0 : index
    %18 = vector.load %arg2[%c224, %c0_9] : memref<896x128xf32, #tpu.memory_space<vmem>>, vector<64x16xf32>
    %cst_10 = arith.constant dense<0.000000e+00> : vector<64x64xf32>
    %19 = tpu.matmul %18, %17, %cst_10 {dimension_numbers = #tpu.dot_dimension_numbers<[1], [0], [0], [1], [0, 0, 1, 1], [], []>} : vector<64x16xf32>, vector<16x64xf32>, vector<64x64xf32> -> vector<64x64xf32>
    %c288 = arith.constant 288 : index
    %c0_11 = arith.constant 0 : index
    %20 = vector.load %arg2[%c288, %c0_11] : memref<896x128xf32, #tpu.memory_space<vmem>>, vector<64x64xf32>
    %21 = arith.addf %19, %20 : vector<64x64xf32>
    %cst_12 = arith.constant 5.000000e-01 : f32
    %22 = vector.broadcast %cst_12 : f32 to vector<64x64xf32>
    %23 = arith.mulf %22, %21 : vector<64x64xf32>
    %cst_13 = arith.constant 2.000000e+00 : f32
    %24 = math.sqrt %cst_13 : f32
    %25 = vector.broadcast %24 : f32 to vector<64x64xf32>
    %26 = arith.divf %21, %25 : vector<64x64xf32>
    %27 = math.erf %26 : vector<64x64xf32>
    %cst_14 = arith.constant 1.000000e+00 : f32
    %28 = vector.broadcast %cst_14 : f32 to vector<64x64xf32>
    %29 = arith.addf %28, %27 : vector<64x64xf32>
    %30 = arith.mulf %23, %29 : vector<64x64xf32>
    %c352 = arith.constant 352 : index
    %c0_15 = arith.constant 0 : index
    %31 = vector.load %arg2[%c352, %c0_15] : memref<896x128xf32, #tpu.memory_space<vmem>>, vector<16x64xf32>
    %cst_16 = arith.constant dense<0.000000e+00> : vector<16x64xf32>
    %32 = tpu.matmul %31, %30, %cst_16 {dimension_numbers = #tpu.dot_dimension_numbers<[1], [0], [0], [1], [0, 0, 1, 1], [], []>} : vector<16x64xf32>, vector<64x64xf32>, vector<16x64xf32> -> vector<16x64xf32>
    %33 = arith.addf %5, %32 : vector<16x64xf32>
    %c368 = arith.constant 368 : index
    %c0_17 = arith.constant 0 : index
    %34 = vector.load %arg2[%c368, %c0_17] : memref<896x128xf32, #tpu.memory_space<vmem>>, vector<16x64xf32>
    %35 = arith.addf %33, %34 : vector<16x64xf32>
    %cst_18 = arith.constant dense<0.000000e+00> : vector<16x64xf32>
    %36 = tpu.matmul %35, %0, %cst_18 {dimension_numbers = #tpu.dot_dimension_numbers<[1], [0], [0], [1], [0, 0, 1, 1], [], []>} : vector<16x64xf32>, vector<64x64xf32>, vector<16x64xf32> -> vector<16x64xf32>
    %37 = arith.mulf %35, %35 : vector<16x64xf32>
    %cst_19 = arith.constant dense<0.000000e+00> : vector<16x64xf32>
    %38 = tpu.matmul %37, %0, %cst_19 {dimension_numbers = #tpu.dot_dimension_numbers<[1], [0], [0], [1], [0, 0, 1, 1], [], []>} : vector<16x64xf32>, vector<64x64xf32>, vector<16x64xf32> -> vector<16x64xf32>
    %39 = arith.subf %35, %36 : vector<16x64xf32>
    %40 = arith.mulf %36, %36 : vector<16x64xf32>
    %41 = arith.subf %38, %40 : vector<16x64xf32>
    %cst_20 = arith.constant 9.99999974E-6 : f32
    %42 = vector.broadcast %cst_20 : f32 to vector<16x64xf32>
    %43 = arith.addf %41, %42 : vector<16x64xf32>
    %44 = math.rsqrt %43 : vector<16x64xf32>
    %45 = arith.mulf %39, %44 : vector<16x64xf32>
    %c384 = arith.constant 384 : index
    %c0_21 = arith.constant 0 : index
    %46 = vector.load %arg2[%c384, %c0_21] : memref<896x128xf32, #tpu.memory_space<vmem>>, vector<64x32xf32>
    %cst_22 = arith.constant dense<0.000000e+00> : vector<16x32xf32>
    %47 = tpu.matmul %45, %46, %cst_22 {dimension_numbers = #tpu.dot_dimension_numbers<[1], [0], [0], [1], [0, 0, 1, 1], [], []>} : vector<16x64xf32>, vector<64x32xf32>, vector<16x32xf32> -> vector<16x32xf32>
    %c448 = arith.constant 448 : index
    %c0_23 = arith.constant 0 : index
    %48 = vector.load %arg2[%c448, %c0_23] : memref<896x128xf32, #tpu.memory_space<vmem>>, vector<16x32xf32>
    %49 = arith.addf %47, %48 : vector<16x32xf32>
    %cst_24 = arith.constant 5.000000e-01 : f32
    %50 = vector.broadcast %cst_24 : f32 to vector<16x32xf32>
    %51 = arith.mulf %50, %49 : vector<16x32xf32>
    %cst_25 = arith.constant 2.000000e+00 : f32
    %52 = math.sqrt %cst_25 : f32
    %53 = vector.broadcast %52 : f32 to vector<16x32xf32>
    %54 = arith.divf %49, %53 : vector<16x32xf32>
    %55 = math.erf %54 : vector<16x32xf32>
    %cst_26 = arith.constant 1.000000e+00 : f32
    %56 = vector.broadcast %cst_26 : f32 to vector<16x32xf32>
    %57 = arith.addf %56, %55 : vector<16x32xf32>
    %58 = arith.mulf %51, %57 : vector<16x32xf32>
    %c464 = arith.constant 464 : index
    %c0_27 = arith.constant 0 : index
    %59 = vector.load %arg2[%c464, %c0_27] : memref<896x128xf32, #tpu.memory_space<vmem>>, vector<32x64xf32>
    %cst_28 = arith.constant dense<0.000000e+00> : vector<16x64xf32>
    %60 = tpu.matmul %58, %59, %cst_28 {dimension_numbers = #tpu.dot_dimension_numbers<[1], [0], [0], [1], [0, 0, 1, 1], [], []>} : vector<16x32xf32>, vector<32x64xf32>, vector<16x64xf32> -> vector<16x64xf32>
    %61 = arith.addf %35, %60 : vector<16x64xf32>
    %c496 = arith.constant 496 : index
    %c0_29 = arith.constant 0 : index
    %62 = vector.load %arg2[%c496, %c0_29] : memref<896x128xf32, #tpu.memory_space<vmem>>, vector<16x64xf32>
    %63 = arith.addf %61, %62 : vector<16x64xf32>
    %cst_30 = arith.constant dense<0.000000e+00> : vector<16x64xf32>
    %64 = tpu.matmul %63, %0, %cst_30 {dimension_numbers = #tpu.dot_dimension_numbers<[1], [0], [0], [1], [0, 0, 1, 1], [], []>} : vector<16x64xf32>, vector<64x64xf32>, vector<16x64xf32> -> vector<16x64xf32>
    %65 = arith.mulf %63, %63 : vector<16x64xf32>
    %cst_31 = arith.constant dense<0.000000e+00> : vector<16x64xf32>
    %66 = tpu.matmul %65, %0, %cst_31 {dimension_numbers = #tpu.dot_dimension_numbers<[1], [0], [0], [1], [0, 0, 1, 1], [], []>} : vector<16x64xf32>, vector<64x64xf32>, vector<16x64xf32> -> vector<16x64xf32>
    %67 = arith.subf %63, %64 : vector<16x64xf32>
    %68 = arith.mulf %64, %64 : vector<16x64xf32>
    %69 = arith.subf %66, %68 : vector<16x64xf32>
    %cst_32 = arith.constant 9.99999974E-6 : f32
    %70 = vector.broadcast %cst_32 : f32 to vector<16x64xf32>
    %71 = arith.addf %69, %70 : vector<16x64xf32>
    %72 = math.rsqrt %71 : vector<16x64xf32>
    %73 = arith.mulf %67, %72 : vector<16x64xf32>
    %c512 = arith.constant 512 : index
    %c0_33 = arith.constant 0 : index
    %74 = vector.load %arg2[%c512, %c0_33] : memref<896x128xf32, #tpu.memory_space<vmem>>, vector<16x64xf32>
    %75 = arith.mulf %73, %74 : vector<16x64xf32>
    %c528 = arith.constant 528 : index
    %c0_34 = arith.constant 0 : index
    %76 = vector.load %arg2[%c528, %c0_34] : memref<896x128xf32, #tpu.memory_space<vmem>>, vector<64x16xf32>
    %cst_35 = arith.constant dense<0.000000e+00> : vector<64x64xf32>
    %77 = tpu.matmul %76, %75, %cst_35 {dimension_numbers = #tpu.dot_dimension_numbers<[1], [0], [0], [1], [0, 0, 1, 1], [], []>} : vector<64x16xf32>, vector<16x64xf32>, vector<64x64xf32> -> vector<64x64xf32>
    %c592 = arith.constant 592 : index
    %c0_36 = arith.constant 0 : index
    %78 = vector.load %arg2[%c592, %c0_36] : memref<896x128xf32, #tpu.memory_space<vmem>>, vector<64x64xf32>
    %79 = arith.addf %77, %78 : vector<64x64xf32>
    %cst_37 = arith.constant 5.000000e-01 : f32
    %80 = vector.broadcast %cst_37 : f32 to vector<64x64xf32>
    %81 = arith.mulf %80, %79 : vector<64x64xf32>
    %cst_38 = arith.constant 2.000000e+00 : f32
    %82 = math.sqrt %cst_38 : f32
    %83 = vector.broadcast %82 : f32 to vector<64x64xf32>
    %84 = arith.divf %79, %83 : vector<64x64xf32>
    %85 = math.erf %84 : vector<64x64xf32>
    %cst_39 = arith.constant 1.000000e+00 : f32
    %86 = vector.broadcast %cst_39 : f32 to vector<64x64xf32>
    %87 = arith.addf %86, %85 : vector<64x64xf32>
    %88 = arith.mulf %81, %87 : vector<64x64xf32>
    %c656 = arith.constant 656 : index
    %c0_40 = arith.constant 0 : index
    %89 = vector.load %arg2[%c656, %c0_40] : memref<896x128xf32, #tpu.memory_space<vmem>>, vector<16x64xf32>
    %cst_41 = arith.constant dense<0.000000e+00> : vector<16x64xf32>
    %90 = tpu.matmul %89, %88, %cst_41 {dimension_numbers = #tpu.dot_dimension_numbers<[1], [0], [0], [1], [0, 0, 1, 1], [], []>} : vector<16x64xf32>, vector<64x64xf32>, vector<16x64xf32> -> vector<16x64xf32>
    %91 = arith.addf %63, %90 : vector<16x64xf32>
    %c672 = arith.constant 672 : index
    %c0_42 = arith.constant 0 : index
    %92 = vector.load %arg2[%c672, %c0_42] : memref<896x128xf32, #tpu.memory_space<vmem>>, vector<16x64xf32>
    %93 = arith.addf %91, %92 : vector<16x64xf32>
    %cst_43 = arith.constant dense<0.000000e+00> : vector<16x64xf32>
    %94 = tpu.matmul %93, %0, %cst_43 {dimension_numbers = #tpu.dot_dimension_numbers<[1], [0], [0], [1], [0, 0, 1, 1], [], []>} : vector<16x64xf32>, vector<64x64xf32>, vector<16x64xf32> -> vector<16x64xf32>
    %95 = arith.mulf %93, %93 : vector<16x64xf32>
    %cst_44 = arith.constant dense<0.000000e+00> : vector<16x64xf32>
    %96 = tpu.matmul %95, %0, %cst_44 {dimension_numbers = #tpu.dot_dimension_numbers<[1], [0], [0], [1], [0, 0, 1, 1], [], []>} : vector<16x64xf32>, vector<64x64xf32>, vector<16x64xf32> -> vector<16x64xf32>
    %97 = arith.subf %93, %94 : vector<16x64xf32>
    %98 = arith.mulf %94, %94 : vector<16x64xf32>
    %99 = arith.subf %96, %98 : vector<16x64xf32>
    %cst_45 = arith.constant 9.99999974E-6 : f32
    %100 = vector.broadcast %cst_45 : f32 to vector<16x64xf32>
    %101 = arith.addf %99, %100 : vector<16x64xf32>
    %102 = math.rsqrt %101 : vector<16x64xf32>
    %103 = arith.mulf %97, %102 : vector<16x64xf32>
    %c688 = arith.constant 688 : index
    %c0_46 = arith.constant 0 : index
    %104 = vector.load %arg2[%c688, %c0_46] : memref<896x128xf32, #tpu.memory_space<vmem>>, vector<64x32xf32>
    %cst_47 = arith.constant dense<0.000000e+00> : vector<16x32xf32>
    %105 = tpu.matmul %103, %104, %cst_47 {dimension_numbers = #tpu.dot_dimension_numbers<[1], [0], [0], [1], [0, 0, 1, 1], [], []>} : vector<16x64xf32>, vector<64x32xf32>, vector<16x32xf32> -> vector<16x32xf32>
    %c752 = arith.constant 752 : index
    %c0_48 = arith.constant 0 : index
    %106 = vector.load %arg2[%c752, %c0_48] : memref<896x128xf32, #tpu.memory_space<vmem>>, vector<16x32xf32>
    %107 = arith.addf %105, %106 : vector<16x32xf32>
    %cst_49 = arith.constant 5.000000e-01 : f32
    %108 = vector.broadcast %cst_49 : f32 to vector<16x32xf32>
    %109 = arith.mulf %108, %107 : vector<16x32xf32>
    %cst_50 = arith.constant 2.000000e+00 : f32
    %110 = math.sqrt %cst_50 : f32
    %111 = vector.broadcast %110 : f32 to vector<16x32xf32>
    %112 = arith.divf %107, %111 : vector<16x32xf32>
    %113 = math.erf %112 : vector<16x32xf32>
    %cst_51 = arith.constant 1.000000e+00 : f32
    %114 = vector.broadcast %cst_51 : f32 to vector<16x32xf32>
    %115 = arith.addf %114, %113 : vector<16x32xf32>
    %116 = arith.mulf %109, %115 : vector<16x32xf32>
    %c768 = arith.constant 768 : index
    %c0_52 = arith.constant 0 : index
    %117 = vector.load %arg2[%c768, %c0_52] : memref<896x128xf32, #tpu.memory_space<vmem>>, vector<32x64xf32>
    %cst_53 = arith.constant dense<0.000000e+00> : vector<16x64xf32>
    %118 = tpu.matmul %116, %117, %cst_53 {dimension_numbers = #tpu.dot_dimension_numbers<[1], [0], [0], [1], [0, 0, 1, 1], [], []>} : vector<16x32xf32>, vector<32x64xf32>, vector<16x64xf32> -> vector<16x64xf32>
    %119 = arith.addf %93, %118 : vector<16x64xf32>
    %c800 = arith.constant 800 : index
    %c0_54 = arith.constant 0 : index
    %120 = vector.load %arg2[%c800, %c0_54] : memref<896x128xf32, #tpu.memory_space<vmem>>, vector<16x64xf32>
    %121 = arith.addf %119, %120 : vector<16x64xf32>
    %cst_55 = arith.constant dense<0.000000e+00> : vector<16x64xf32>
    %122 = tpu.matmul %121, %0, %cst_55 {dimension_numbers = #tpu.dot_dimension_numbers<[1], [0], [0], [1], [0, 0, 1, 1], [], []>} : vector<16x64xf32>, vector<64x64xf32>, vector<16x64xf32> -> vector<16x64xf32>
    %123 = arith.mulf %121, %121 : vector<16x64xf32>
    %cst_56 = arith.constant dense<0.000000e+00> : vector<16x64xf32>
    %124 = tpu.matmul %123, %0, %cst_56 {dimension_numbers = #tpu.dot_dimension_numbers<[1], [0], [0], [1], [0, 0, 1, 1], [], []>} : vector<16x64xf32>, vector<64x64xf32>, vector<16x64xf32> -> vector<16x64xf32>
    %125 = arith.subf %121, %122 : vector<16x64xf32>
    %126 = arith.mulf %122, %122 : vector<16x64xf32>
    %127 = arith.subf %124, %126 : vector<16x64xf32>
    %cst_57 = arith.constant 9.99999974E-6 : f32
    %128 = vector.broadcast %cst_57 : f32 to vector<16x64xf32>
    %129 = arith.addf %127, %128 : vector<16x64xf32>
    %130 = math.rsqrt %129 : vector<16x64xf32>
    %131 = arith.mulf %125, %130 : vector<16x64xf32>
    %c816 = arith.constant 816 : index
    %c0_58 = arith.constant 0 : index
    %132 = vector.load %arg2[%c816, %c0_58] : memref<896x128xf32, #tpu.memory_space<vmem>>, vector<8x16xf32>
    %cst_59 = arith.constant dense<0.000000e+00> : vector<8x64xf32>
    %133 = tpu.matmul %132, %131, %cst_59 {dimension_numbers = #tpu.dot_dimension_numbers<[1], [0], [0], [1], [0, 0, 1, 1], [], []>} : vector<8x16xf32>, vector<16x64xf32>, vector<8x64xf32> -> vector<8x64xf32>
    %c824 = arith.constant 824 : index
    %c0_60 = arith.constant 0 : index
    %134 = vector.load %arg2[%c824, %c0_60] : memref<896x128xf32, #tpu.memory_space<vmem>>, vector<64x128xf32>
    %cst_61 = arith.constant dense<0.000000e+00> : vector<8x128xf32>
    %135 = tpu.matmul %133, %134, %cst_61 {dimension_numbers = #tpu.dot_dimension_numbers<[1], [0], [0], [1], [0, 0, 1, 1], [], []>} : vector<8x64xf32>, vector<64x128xf32>, vector<8x128xf32> -> vector<8x128xf32>
    %c888 = arith.constant 888 : index
    %c0_62 = arith.constant 0 : index
    %136 = vector.load %arg2[%c888, %c0_62] : memref<896x128xf32, #tpu.memory_space<vmem>>, vector<8x128xf32>
    %137 = arith.addf %135, %136 : vector<8x128xf32>
    %c0_63 = arith.constant 0 : index
    %c0_64 = arith.constant 0 : index
    %138 = vector.load %arg3[%c0_63, %c0_64] : memref<8x128xf32, #tpu.memory_space<vmem>>, vector<8x128xf32>
    tpu.vector_store %arg3[%c0_63, %c0_64], %137 {strides = array<i32>} : memref<8x128xf32, #tpu.memory_space<vmem>>, vector<8x128xf32>,
    return
  }
  func.func @transform_0(%arg0: i32) -> (i32, i32) {
    %c0_i32 = arith.constant 0 : i32
    %c0_i32_0 = arith.constant 0 : i32
    %c0_i32_1 = arith.constant 0 : i32
    return %c0_i32, %c0_i32_0 : i32, i32
  }
  func.func @transform_1(%arg0: i32) -> (i32, i32) {
    %c0_i32 = arith.constant 0 : i32
    %c0_i32_0 = arith.constant 0 : i32
    %c0_i32_1 = arith.constant 0 : i32
    return %c0_i32, %c0_i32_0 : i32, i32
  }
  func.func @transform_2(%arg0: i32) -> (i32, i32) {
    %c0_i32 = arith.constant 0 : i32
    %c0_i32_0 = arith.constant 0 : i32
    %c0_i32_1 = arith.constant 0 : i32
    return %c0_i32, %c0_i32_0 : i32, i32
  }
}

</mosaic_0001>

<llo_original>
// kernel: squeeze.1
$region0: #{squeeze.1}
  %s0 = inlined_call_operand.vmem [shape: f32[128], index: 0, kind: input, shape index: {}]
  %s1 = inlined_call_operand.hbm [shape: f32[2,64], index: 1, kind: output, shape index: {}]
  $region1: #{squeeze.1} parent=0
    #allocation0 [shape = 'u8[1024]{0}', space=vmem, size = 0x400, scoped, tag = 'operand span for operand 1']
    #allocation1 [shape = 's32[1]{0}', space=sflag, size = 0x4, scoped, tag = 'scoped memory for squeeze.1']
    #allocation2 [shape = 'u8[4096]{0}', space=vmem, size = 0x1000, scoped, tag = 'scoped mem for output reshape']
    #allocation3 [shape = 'u8[4096]{0}', space=vmem, size = 0x1000, scoped, tag = 'scoped mem for input reshape']
    %2 = vsyncpa [#allocation1], 0
    %s4 = sshllo.u32 0, 1
    %v5 = vld [vmem:[%s0] sm:%s4]
    %6 = vst [vmem:[#allocation3] sm:%s4] %v5
    %v7 = vld [vmem:[#allocation3] sm:$0x1]
    %vm8 = vcmask 523264
    %9 = vst.msk [vmem:[#allocation2] sm:$0x1] %vm8, %v7
    %v10 = vld [vmem:[#allocation3] sm:$0x1]
    %11 = vrot.lane.b32.xlu0 %v10, 64
    %v12 = vpop.permute.xlu0 %11
    %vm13 = vcmask 523264
    %s14 = scalar_lea.vmem [#allocation2], 1
    %15 = vst.msk [vmem:[%s14] sm:$0x1] %vm13, %v12
    %s17 = sshllo.u32 0, 2
    %v19 = vld [vmem:[#allocation2] sm:%s17]
    %s20 = sshllo.u32 0, 2
    %21 = vst [vmem:[#allocation0] sm:%s20] %v19
    %s23 = ssub.s32 32, 32
    %24 = vsyncadd [#allocation1], %s23
    %s26 = sshll.u32 [#allocation0], 4
    %s27 = int_to_ptr.vmem [resolvable:$true] %s26
    %29 = dma.vmem_to_hbm [thread:$0]  %s27, 32, %s1, [#allocation1]
    %30 = dma.done [#allocation1], 32
    %31 = vsyncpa [#allocation1], 1

// kernel: mlp_mixer_forward.1
$region0: #{mlp_mixer_forward.1}
  #allocation0 [shape = 'u32[]', space=smem, size = 0x4, offset = 0x4, fixed_abs, tag = 'smem constant byte address 0x4 - core index']
  #allocation1 [shape = 'u32[144,128]{1,0:T(1,128)}', space=vmem, size = 0x12000, scoped, tag = 'internal scratch']
  %s0 = inlined_call_operand.vmem [shape: f32[16,128], index: 0, kind: input, shape index: {}]
  %s1 = inlined_call_operand.vmem [shape: f32[896,128], index: 1, kind: input, shape index: {}]
  %s2 = inlined_call_operand.vmem [shape: f32[8,128], index: 2, kind: output, shape index: {}]
  %s3 = sld [smem:[#allocation0]]
  $region18: #{mlp_mixer_forward.1} parent=0
    _
  %s5 = ssub.s32 1, %s3
  %s6 = scalar_select 0, %s5, %s3
  // Predicated region
  $region2: #{mlp_mixer_forward.1} parent=0 // pred_check
    _
  $region3: #{mlp_mixer_forward.1} parent=0 // pred_check_branch
    %8 = sbr.rel (0) target = $region5
  $region4: #{mlp_mixer_forward.1} parent=0 // pred_region
    _
  $region5: #{mlp_mixer_forward.1} parent=0 // pred_fallthru
    _
  // Predicated region
  $region6: #{mlp_mixer_forward.1} parent=0 // pred_check
    _
  $region7: #{mlp_mixer_forward.1} parent=0 // pred_check_branch
    %10 = sbr.rel (0) target = $region9
  $region8: #{mlp_mixer_forward.1} parent=0 // pred_region
    _
  $region9: #{mlp_mixer_forward.1} parent=0 // pred_fallthru
    _
  %v11 = vld [vmem:[%s1 + $0x90] sm:$0xff]
  %v12 = vld [vmem:[%s1 + $0x98] sm:$0xff]
  %v13 = vld [vmem:[%s1 + $0xa0] sm:$0xff]
  %v14 = vld [vmem:[%s1 + $0xa8] sm:$0xff]
  %v15 = vld [vmem:[%s1 + $0xb0] sm:$0xff]
  %v16 = vld [vmem:[%s1 + $0xb8] sm:$0xff]
  %v17 = vld [vmem:[%s1 + $0xc0] sm:$0xff]
  %v18 = vld [vmem:[%s1 + $0xc8] sm:$0xff]
  %v19 = vld [vmem:[%s0] sm:$0xff]
  %v20 = vld [vmem:[%s0 + $0x8] sm:$0xff]
  %v21 = vld [vmem:[%s1] sm:$0xff]
  %v22 = vld [vmem:[%s1 + $0x8] sm:$0xff]
  %v23 = vld [vmem:[%s1 + $0x10] sm:$0xff]
  %v24 = vld [vmem:[%s1 + $0x18] sm:$0xff]
  %v25 = vld [vmem:[%s1 + $0x20] sm:$0xff]
  %v26 = vld [vmem:[%s1 + $0x28] sm:$0xff]
  %v27 = vld [vmem:[%s1 + $0x30] sm:$0xff]
  %v28 = vld [vmem:[%s1 + $0x38] sm:$0xff]
  %v29 = vld [vmem:[%s1 + $0x40] sm:$0xff]
  %v30 = vld [vmem:[%s1 + $0x48] sm:$0xff]
  %v31 = vld [vmem:[%s1 + $0x50] sm:$0xff]
  %v32 = vld [vmem:[%s1 + $0x58] sm:$0xff]
  %v33 = vld [vmem:[%s1 + $0x60] sm:$0xff]
  %v34 = vld [vmem:[%s1 + $0x68] sm:$0xff]
  %v35 = vld [vmem:[%s1 + $0x70] sm:$0xff]
  %v36 = vld [vmem:[%s1 + $0x78] sm:$0xff]
  %v37 = vld [vmem:[%s1 + $0x80] sm:$0xff]
  %v38 = vld [vmem:[%s1 + $0x88] sm:$0xff]
  %39 = vmatprep.subr.mxu0 0.0
  %40 = vmatpush1.msra.mxu0 %v21
  %41 = vmatprep.subr.mxu0 0.0
  %42 = vmatpush1.msra.mxu0 %v22
  %43 = vmatprep.subr.mxu0 0.0
  %44 = vmatpush1.msra.mxu0 %v23
  %45 = vmatprep.subr.mxu0 0.0
  %46 = vmatpush1.msra.mxu0 %v24
  %47 = vmatprep.subr.mxu0 0.0
  %48 = vmatpush1.msra.mxu0 %v25
  %49 = vmatprep.subr.mxu0 0.0
  %50 = vmatpush1.msra.mxu0 %v26
  %51 = vmatprep.subr.mxu0 0.0
  %52 = vmatpush1.msra.mxu0 %v27
  %53 = vmatprep.subr.mxu0 0.0
  %54 = vmatpush1.msra.mxu0 %v28
  %55 = vmatprep.subr.mxu0 0.0
  %56 = vmatpush1.msra.mxu0 %v29
  %57 = vmatprep.subr.mxu0 0.0
  %58 = vmatpush1.msra.mxu0 %v30
  %59 = vmatprep.subr.mxu0 0.0
  %60 = vmatpush1.msra.mxu0 %v31
  %61 = vmatprep.subr.mxu0 0.0
  %62 = vmatpush1.msra.mxu0 %v32
  %63 = vmatprep.subr.mxu0 0.0
  %64 = vmatpush1.msra.mxu0 %v33
  %65 = vmatprep.subr.mxu0 0.0
  %66 = vmatpush1.msra.mxu0 %v34
  %67 = vmatprep.subr.mxu0 0.0
  %68 = vmatpush1.msra.mxu0 %v35
  %69 = vmatprep.subr.mxu0 0.0
  %70 = vmatpush1.msra.mxu0 %v36
  %71 = vmatprep.subr.mxu0 0.0
  %72 = vmatpush1.msra.mxu0 0.0
  %73 = vmatprep.subr.mxu0 0.0
  %74 = vmatpush1.msra.mxu0 0.0
  %75 = vmatprep.subr.mxu0 0.0
  %76 = vmatpush1.msra.mxu0 0.0
  %77 = vmatprep.subr.mxu0 0.0
  %78 = vmatpush1.msra.mxu0 0.0
  %79 = vmatprep.subr.mxu0 0.0
  %80 = vmatpush1.msra.mxu0 0.0
  %81 = vmatprep.subr.mxu0 0.0
  %82 = vmatpush1.msra.mxu0 0.0
  %83 = vmatprep.subr.mxu0 0.0
  %84 = vmatpush1.msra.mxu0 0.0
  %85 = vmatprep.subr.mxu0 0.0
  %86 = vmatpush1.msra.mxu0 0.0
  %87 = vmatprep.subr.mxu0 0.0
  %88 = vmatpush1.msra.mxu0 0.0
  %89 = vmatprep.subr.mxu0 0.0
  %90 = vmatpush1.msra.mxu0 0.0
  %91 = vmatprep.subr.mxu0 0.0
  %92 = vmatpush1.msra.mxu0 0.0
  %93 = vmatprep.subr.mxu0 0.0
  %94 = vmatpush1.msra.mxu0 0.0
  %95 = vmatprep.subr.mxu0 0.0
  %96 = vmatpush1.msra.mxu0 0.0
  %97 = vmatprep.subr.mxu0 0.0
  %98 = vmatpush1.msra.mxu0 0.0
  %99 = vmatprep.subr.mxu0 0.0
  %100 = vmatpush1.msra.mxu0 0.0
  %101 = vmatprep.subr.mxu0 0.0
  %102 = vmatpush1.msra.mxu0 0.0
  %103 = vmatprep.mubr.f32.mxu0 0.0
  %104 = vmatmul.mubr.f32.gmra.mrb[0].mxu0 %v19
  %v105 = vpop.f32.mrb[0].mxu0
  %v106 = vadd.f32 %v37, %v105
  %v107 = vpop.f32.mrb[0].mxu0
  %108 = vmatprep.mubr.f32.mxu0 0.0
  %109 = vmatmul.mubr.f32.gmra.mrb[0].mxu0 %v20
  %v110 = vpop.f32.mrb[0].mxu0
  %v111 = vadd.f32 %v38, %v110
  %v112 = vpop.f32.mrb[0].mxu0
  %113 = vdwg.mxu0
  %vm114 = vcmask 523264
  %v116 = vsel %vm114, %v106, 0
  %v119 = vsel %vm114, %v111, 0
  %121 = vmatprep.subr.mxu0 0.0
  %122 = vmatpush1.msra.mxu0 %v11
  %123 = vmatprep.subr.mxu0 0.0
  %124 = vmatpush1.msra.mxu0 %v12
  %125 = vmatprep.subr.mxu0 0.0
  %126 = vmatpush1.msra.mxu0 %v13
  %127 = vmatprep.subr.mxu0 0.0
  %128 = vmatpush1.msra.mxu0 %v14
  %129 = vmatprep.subr.mxu0 0.0
  %130 = vmatpush1.msra.mxu0 %v15
  %131 = vmatprep.subr.mxu0 0.0
  %132 = vmatpush1.msra.mxu0 %v16
  %133 = vmatprep.subr.mxu0 0.0
  %134 = vmatpush1.msra.mxu0 %v17
  %135 = vmatprep.subr.mxu0 0.0
  %136 = vmatpush1.msra.mxu0 %v18
  %137 = vmatprep.subr.mxu0 0.0
  %138 = vmatpush1.msra.mxu0 0.0
  %139 = vmatprep.subr.mxu0 0.0
  %140 = vmatpush1.msra.mxu0 0.0
  %141 = vmatprep.subr.mxu0 0.0
  %142 = vmatpush1.msra.mxu0 0.0
  %143 = vmatprep.subr.mxu0 0.0
  %144 = vmatpush1.msra.mxu0 0.0
  %145 = vmatprep.subr.mxu0 0.0
  %146 = vmatpush1.msra.mxu0 0.0
  %147 = vmatprep.subr.mxu0 0.0
  %148 = vmatpush1.msra.mxu0 0.0
  %149 = vmatprep.subr.mxu0 0.0
  %150 = vmatpush1.msra.mxu0 0.0
  %151 = vmatprep.subr.mxu0 0.0
  %152 = vmatpush1.msra.mxu0 0.0
  %153 = vmatprep.subr.mxu0 0.0
  %154 = vmatpush1.msra.mxu0 0.0
  %155 = vmatprep.subr.mxu0 0.0
  %156 = vmatpush1.msra.mxu0 0.0
  %157 = vmatprep.subr.mxu0 0.0
  %158 = vmatpush1.msra.mxu0 0.0
  %159 = vmatprep.subr.mxu0 0.0
  %160 = vmatpush1.msra.mxu0 0.0
  %161 = vmatprep.subr.mxu0 0.0
  %162 = vmatpush1.msra.mxu0 0.0
  %163 = vmatprep.subr.mxu0 0.0
  %164 = vmatpush1.msra.mxu0 0.0
  %165 = vmatprep.subr.mxu0 0.0
  %166 = vmatpush1.msra.mxu0 0.0
  %167 = vmatprep.subr.mxu0 0.0
  %168 = vmatpush1.msra.mxu0 0.0
  %169 = vmatprep.subr.mxu0 0.0
  %170 = vmatpush1.msra.mxu0 0.0
  %171 = vmatprep.subr.mxu0 0.0
  %172 = vmatpush1.msra.mxu0 0.0
  %173 = vmatprep.subr.mxu0 0.0
  %174 = vmatpush1.msra.mxu0 0.0
  %175 = vmatprep.subr.mxu0 0.0
  %176 = vmatpush1.msra.mxu0 0.0
  %177 = vmatprep.subr.mxu0 0.0
  %178 = vmatpush1.msra.mxu0 0.0
  %179 = vmatprep.subr.mxu0 0.0
  %180 = vmatpush1.msra.mxu0 0.0
  %181 = vmatprep.subr.mxu0 0.0
  %182 = vmatpush1.msra.mxu0 0.0
  %183 = vmatprep.subr.mxu0 0.0
  %184 = vmatpush1.msra.mxu0 0.0
  %185 = vmatprep.mubr.f32.mxu0 0.0
  %186 = vmatmul.mubr.f32.gmra.mrb[0].mxu0 %v116
  %v187 = vpop.f32.mrb[0].mxu0
  %v188 = vadd.f32 0.0, %v187
  %v189 = vpop.f32.mrb[0].mxu0
  %190 = vmatprep.mubr.f32.mxu0 0.0
  %191 = vmatmul.mubr.f32.gmra.mrb[0].mxu0 %v119
  %v192 = vpop.f32.mrb[0].mxu0
  %v193 = vadd.f32 0.0, %v192
  %v194 = vpop.f32.mrb[0].mxu0
  %195 = vdwg.mxu0
  %v196 = vmul.f32 %v106, %v106
  %v197 = vmul.f32 %v111, %v111
  %v199 = vsel %vm114, %v196, 0
  %v202 = vsel %vm114, %v197, 0
  %204 = vmatprep.subr.mxu0 0.0
  %205 = vmatpush1.msra.mxu0 %v11
  %206 = vmatprep.subr.mxu0 0.0
  %207 = vmatpush1.msra.mxu0 %v12
  %208 = vmatprep.subr.mxu0 0.0
  %209 = vmatpush1.msra.mxu0 %v13
  %210 = vmatprep.subr.mxu0 0.0
  %211 = vmatpush1.msra.mxu0 %v14
  %212 = vmatprep.subr.mxu0 0.0
  %213 = vmatpush1.msra.mxu0 %v15
  %214 = vmatprep.subr.mxu0 0.0
  %215 = vmatpush1.msra.mxu0 %v16
  %216 = vmatprep.subr.mxu0 0.0
  %217 = vmatpush1.msra.mxu0 %v17
  %218 = vmatprep.subr.mxu0 0.0
  %219 = vmatpush1.msra.mxu0 %v18
  %220 = vmatprep.subr.mxu0 0.0
  %221 = vmatpush1.msra.mxu0 0.0
  %222 = vmatprep.subr.mxu0 0.0
  %223 = vmatpush1.msra.mxu0 0.0
  %224 = vmatprep.subr.mxu0 0.0
  %225 = vmatpush1.msra.mxu0 0.0
  %226 = vmatprep.subr.mxu0 0.0
  %227 = vmatpush1.msra.mxu0 0.0
  %228 = vmatprep.subr.mxu0 0.0
  %229 = vmatpush1.msra.mxu0 0.0
  %230 = vmatprep.subr.mxu0 0.0
  %231 = vmatpush1.msra.mxu0 0.0
  %232 = vmatprep.subr.mxu0 0.0
  %233 = vmatpush1.msra.mxu0 0.0
  %234 = vmatprep.subr.mxu0 0.0
  %235 = vmatpush1.msra.mxu0 0.0
  %236 = vmatprep.subr.mxu0 0.0
  %237 = vmatpush1.msra.mxu0 0.0
  %238 = vmatprep.subr.mxu0 0.0
  %239 = vmatpush1.msra.mxu0 0.0
  %240 = vmatprep.subr.mxu0 0.0
  %241 = vmatpush1.msra.mxu0 0.0
  %242 = vmatprep.subr.mxu0 0.0
  %243 = vmatpush1.msra.mxu0 0.0
  %244 = vmatprep.subr.mxu0 0.0
  %245 = vmatpush1.msra.mxu0 0.0
  %246 = vmatprep.subr.mxu0 0.0
  %247 = vmatpush1.msra.mxu0 0.0
  %248 = vmatprep.subr.mxu0 0.0
  %249 = vmatpush1.msra.mxu0 0.0
  %250 = vmatprep.subr.mxu0 0.0
  %251 = vmatpush1.msra.mxu0 0.0
  %252 = vmatprep.subr.mxu0 0.0
  %253 = vmatpush1.msra.mxu0 0.0
  %254 = vmatprep.subr.mxu0 0.0
  %255 = vmatpush1.msra.mxu0 0.0
  %256 = vmatprep.subr.mxu0 0.0
  %257 = vmatpush1.msra.mxu0 0.0
  %258 = vmatprep.subr.mxu0 0.0
  %259 = vmatpush1.msra.mxu0 0.0
  %260 = vmatprep.subr.mxu0 0.0
  %261 = vmatpush1.msra.mxu0 0.0
  %262 = vmatprep.subr.mxu0 0.0
  %263 = vmatpush1.msra.mxu0 0.0
  %264 = vmatprep.subr.mxu0 0.0
  %265 = vmatpush1.msra.mxu0 0.0
  %266 = vmatprep.subr.mxu0 0.0
  %267 = vmatpush1.msra.mxu0 0.0
  %268 = vmatprep.mubr.f32.mxu0 0.0
  %269 = vmatmul.mubr.f32.gmra.mrb[0].mxu0 %v199
  %v270 = vpop.f32.mrb[0].mxu0
  %v271 = vadd.f32 0.0, %v270
  %v272 = vpop.f32.mrb[0].mxu0
  %273 = vmatprep.mubr.f32.mxu0 0.0
  %274 = vmatmul.mubr.f32.gmra.mrb[0].mxu0 %v202
  %v275 = vpop.f32.mrb[0].mxu0
  %v276 = vadd.f32 0.0, %v275
  %v277 = vpop.f32.mrb[0].mxu0
  %278 = vdwg.mxu0
  %v279 = vsub.f32 %v106, %v188
  %v280 = vsub.f32 %v111, %v193
  %v281 = vmul.f32 %v188, %v188
  %v282 = vmul.f32 %v193, %v193
  %v283 = vsub.f32 %v271, %v281
  %v284 = vsub.f32 %v276, %v282
  %v285 = vadd.f32 %v283, 1e-05
  %v286 = vadd.f32 %v284, 1e-05
  %v287 = vrsqrt.pop %v285
  %v288 = vrsqrt.pop %v286
  %v289 = vmul.f32 %v279, %v287
  %v290 = vmul.f32 %v280, %v288
  %v291 = vld [vmem:[%s1 + $0xd0] sm:$0xff]
  %v292 = vld [vmem:[%s1 + $0xd8] sm:$0xff]
  %v293 = vmul.f32 %v289, %v291
  %v294 = vmul.f32 %v290, %v292
  %v295 = vld [vmem:[%s1 + $0xe0] sm:$0xff]
  %v296 = vld [vmem:[%s1 + $0xe8] sm:$0xff]
  %v297 = vld [vmem:[%s1 + $0xf0] sm:$0xff]
  %v298 = vld [vmem:[%s1 + $0xf8] sm:$0xff]
  %v299 = vld [vmem:[%s1 + $0x100] sm:$0xff]
  %v300 = vld [vmem:[%s1 + $0x108] sm:$0xff]
  %v301 = vld [vmem:[%s1 + $0x110] sm:$0xff]
  %v302 = vld [vmem:[%s1 + $0x118] sm:$0xff]
  %v303 = vld [vmem:[%s1 + $0x120] sm:$0xff]
  %v304 = vld [vmem:[%s1 + $0x128] sm:$0xff]
  %v305 = vld [vmem:[%s1 + $0x130] sm:$0xff]
  %v306 = vld [vmem:[%s1 + $0x138] sm:$0xff]
  %v307 = vld [vmem:[%s1 + $0x140] sm:$0xff]
  %v308 = vld [vmem:[%s1 + $0x148] sm:$0xff]
  %v309 = vld [vmem:[%s1 + $0x150] sm:$0xff]
  %v310 = vld [vmem:[%s1 + $0x158] sm:$0xff]
  %vm311 = vcmask 130048
  %v313 = vsel %vm311, %v295, 0
  %v316 = vsel %vm311, %v296, 0
  %v319 = vsel %vm311, %v297, 0
  %v322 = vsel %vm311, %v298, 0
  %v325 = vsel %vm311, %v299, 0
  %v328 = vsel %vm311, %v300, 0
  %v331 = vsel %vm311, %v301, 0
  %v334 = vsel %vm311, %v302, 0
  %336 = vmatprep.subr.mxu0 0.0
  %337 = vmatpush1.msra.mxu0 %v293
  %338 = vmatprep.subr.mxu0 0.0
  %339 = vmatpush1.msra.mxu0 %v294
  %340 = vmatprep.subr.mxu0 0.0
  %341 = vmatpush1.msra.mxu0 0.0
  %342 = vmatprep.subr.mxu0 0.0
  %343 = vmatpush1.msra.mxu0 0.0
  %344 = vmatprep.subr.mxu0 0.0
  %345 = vmatpush1.msra.mxu0 0.0
  %346 = vmatprep.subr.mxu0 0.0
  %347 = vmatpush1.msra.mxu0 0.0
  %348 = vmatprep.subr.mxu0 0.0
  %349 = vmatpush1.msra.mxu0 0.0
  %350 = vmatprep.subr.mxu0 0.0
  %351 = vmatpush1.msra.mxu0 0.0
  %352 = vmatprep.subr.mxu0 0.0
  %353 = vmatpush1.msra.mxu0 0.0
  %354 = vmatprep.subr.mxu0 0.0
  %355 = vmatpush1.msra.mxu0 0.0
  %356 = vmatprep.subr.mxu0 0.0
  %357 = vmatpush1.msra.mxu0 0.0
  %358 = vmatprep.subr.mxu0 0.0
  %359 = vmatpush1.msra.mxu0 0.0
  %360 = vmatprep.subr.mxu0 0.0
  %361 = vmatpush1.msra.mxu0 0.0
  %362 = vmatprep.subr.mxu0 0.0
  %363 = vmatpush1.msra.mxu0 0.0
  %364 = vmatprep.subr.mxu0 0.0
  %365 = vmatpush1.msra.mxu0 0.0
  %366 = vmatprep.subr.mxu0 0.0
  %367 = vmatpush1.msra.mxu0 0.0
  %368 = vmatprep.subr.mxu0 0.0
  %369 = vmatpush1.msra.mxu0 0.0
  %370 = vmatprep.subr.mxu0 0.0
  %371 = vmatpush1.msra.mxu0 0.0
  %372 = vmatprep.subr.mxu0 0.0
  %373 = vmatpush1.msra.mxu0 0.0
  %374 = vmatprep.subr.mxu0 0.0
  %375 = vmatpush1.msra.mxu0 0.0
  %376 = vmatprep.subr.mxu0 0.0
  %377 = vmatpush1.msra.mxu0 0.0
  %378 = vmatprep.subr.mxu0 0.0
  %379 = vmatpush1.msra.mxu0 0.0
  %380 = vmatprep.subr.mxu0 0.0
  %381 = vmatpush1.msra.mxu0 0.0
  %382 = vmatprep.subr.mxu0 0.0
  %383 = vmatpush1.msra.mxu0 0.0
  %384 = vmatprep.subr.mxu0 0.0
  %385 = vmatpush1.msra.mxu0 0.0
  %386 = vmatprep.subr.mxu0 0.0
  %387 = vmatpush1.msra.mxu0 0.0
  %388 = vmatprep.subr.mxu0 0.0
  %389 = vmatpush1.msra.mxu0 0.0
  %390 = vmatprep.subr.mxu0 0.0
  %391 = vmatpush1.msra.mxu0 0.0
  %392 = vmatprep.subr.mxu0 0.0
  %393 = vmatpush1.msra.mxu0 0.0
  %394 = vmatprep.subr.mxu0 0.0
  %395 = vmatpush1.msra.mxu0 0.0
  %396 = vmatprep.subr.mxu0 0.0
  %397 = vmatpush1.msra.mxu0 0.0
  %398 = vmatprep.subr.mxu0 0.0
  %399 = vmatpush1.msra.mxu0 0.0
  %400 = vmatprep.mubr.f32.mxu0 0.0
  %401 = vmatmul.mubr.f32.gmra.mrb[0].mxu0 %v313
  %v402 = vpop.f32.mrb[0].mxu0
  %v403 = vadd.f32 %v303, %v402
  %v404 = vpop.f32.mrb[0].mxu0
  %405 = vmatprep.mubr.f32.mxu0 0.0
  %406 = vmatmul.mubr.f32.gmra.mrb[0].mxu0 %v316
  %v407 = vpop.f32.mrb[0].mxu0
  %v408 = vadd.f32 %v304, %v407
  %v409 = vpop.f32.mrb[0].mxu0
  %410 = vmatprep.mubr.f32.mxu0 0.0
  %411 = vmatmul.mubr.f32.gmra.mrb[0].mxu0 %v319
  %v412 = vpop.f32.mrb[0].mxu0
  %v413 = vadd.f32 %v305, %v412
  %v414 = vpop.f32.mrb[0].mxu0
  %415 = vmatprep.mubr.f32.mxu0 0.0
  %416 = vmatmul.mubr.f32.gmra.mrb[0].mxu0 %v322
  %v417 = vpop.f32.mrb[0].mxu0
  %v418 = vadd.f32 %v306, %v417
  %v419 = vpop.f32.mrb[0].mxu0
  %420 = vmatprep.mubr.f32.mxu0 0.0
  %421 = vmatmul.mubr.f32.gmra.mrb[0].mxu0 %v325
  %v422 = vpop.f32.mrb[0].mxu0
  %v423 = vadd.f32 %v307, %v422
  %v424 = vpop.f32.mrb[0].mxu0
  %425 = vmatprep.mubr.f32.mxu0 0.0
  %426 = vmatmul.mubr.f32.gmra.mrb[0].mxu0 %v328
  %v427 = vpop.f32.mrb[0].mxu0
  %v428 = vadd.f32 %v308, %v427
  %v429 = vpop.f32.mrb[0].mxu0
  %430 = vmatprep.mubr.f32.mxu0 0.0
  %431 = vmatmul.mubr.f32.gmra.mrb[0].mxu0 %v331
  %v432 = vpop.f32.mrb[0].mxu0
  %v433 = vadd.f32 %v309, %v432
  %v434 = vpop.f32.mrb[0].mxu0
  %435 = vmatprep.mubr.f32.mxu0 0.0
  %436 = vmatmul.mubr.f32.gmra.mrb[0].mxu0 %v334
  %v437 = vpop.f32.mrb[0].mxu0
  %v438 = vadd.f32 %v310, %v437
  %v439 = vpop.f32.mrb[0].mxu0
  %440 = vdwg.mxu0
  %v441 = vmul.f32 %v403, 0.5
  %v442 = vmul.f32 %v408, 0.5
  %v443 = vmul.f32 %v413, 0.5
  %v444 = vmul.f32 %v418, 0.5
  %v445 = vmul.f32 %v423, 0.5
  %v446 = vmul.f32 %v428, 0.5
  %v447 = vmul.f32 %v433, 0.5
  %v448 = vmul.f32 %v438, 0.5
  %v449 = vrcp.pop 1.4142135
  %v450 = vmul.f32 %v403, %v449
  %v451 = vmul.f32 %v408, %v449
  %v452 = vmul.f32 %v413, %v449
  %v453 = vmul.f32 %v418, %v449
  %v454 = vmul.f32 %v423, %v449
  %v455 = vmul.f32 %v428, %v449
  %v456 = vmul.f32 %v433, %v449
  %v457 = vmul.f32 %v438, %v449
  %v458 = verf.f32.pop %v450
  %v459 = verf.f32.pop %v451
  %v460 = verf.f32.pop %v452
  %v461 = verf.f32.pop %v453
  %v462 = verf.f32.pop %v454
  %v463 = verf.f32.pop %v455
  %v464 = verf.f32.pop %v456
  %v465 = verf.f32.pop %v457
  %v466 = vadd.f32 %v458, 1.0
  %v467 = vadd.f32 %v459, 1.0
  %v468 = vadd.f32 %v460, 1.0
  %v469 = vadd.f32 %v461, 1.0
  %v470 = vadd.f32 %v462, 1.0
  %v471 = vadd.f32 %v463, 1.0
  %v472 = vadd.f32 %v464, 1.0
  %v473 = vadd.f32 %v465, 1.0
  %v474 = vmul.f32 %v441, %v466
  %v475 = vmul.f32 %v442, %v467
  %v476 = vmul.f32 %v443, %v468
  %v477 = vmul.f32 %v444, %v469
  %v478 = vmul.f32 %v445, %v470
  %v479 = vmul.f32 %v446, %v471
  %v480 = vmul.f32 %v447, %v472
  %v481 = vmul.f32 %v448, %v473
  %v482 = vld [vmem:[%s1 + $0x160] sm:$0xff]
  %v483 = vld [vmem:[%s1 + $0x168] sm:$0xff]
  %v485 = vsel %vm114, %v482, 0
  %v488 = vsel %vm114, %v483, 0
  %490 = vmatprep.subr.mxu0 0.0
  %491 = vmatpush1.msra.mxu0 %v474
  %492 = vmatprep.subr.mxu0 0.0
  %493 = vmatpush1.msra.mxu0 %v475
  %494 = vmatprep.subr.mxu0 0.0
  %495 = vmatpush1.msra.mxu0 %v476
  %496 = vmatprep.subr.mxu0 0.0
  %497 = vmatpush1.msra.mxu0 %v477
  %498 = vmatprep.subr.mxu0 0.0
  %499 = vmatpush1.msra.mxu0 %v478
  %500 = vmatprep.subr.mxu0 0.0
  %501 = vmatpush1.msra.mxu0 %v479
  %502 = vmatprep.subr.mxu0 0.0
  %503 = vmatpush1.msra.mxu0 %v480
  %504 = vmatprep.subr.mxu0 0.0
  %505 = vmatpush1.msra.mxu0 %v481
  %506 = vmatprep.subr.mxu0 0.0
  %507 = vmatpush1.msra.mxu0 0.0
  %508 = vmatprep.subr.mxu0 0.0
  %509 = vmatpush1.msra.mxu0 0.0
  %510 = vmatprep.subr.mxu0 0.0
  %511 = vmatpush1.msra.mxu0 0.0
  %512 = vmatprep.subr.mxu0 0.0
  %513 = vmatpush1.msra.mxu0 0.0
  %514 = vmatprep.subr.mxu0 0.0
  %515 = vmatpush1.msra.mxu0 0.0
  %516 = vmatprep.subr.mxu0 0.0
  %517 = vmatpush1.msra.mxu0 0.0
  %518 = vmatprep.subr.mxu0 0.0
  %519 = vmatpush1.msra.mxu0 0.0
  %520 = vmatprep.subr.mxu0 0.0
  %521 = vmatpush1.msra.mxu0 0.0
  %522 = vmatprep.subr.mxu0 0.0
  %523 = vmatpush1.msra.mxu0 0.0
  %524 = vmatprep.subr.mxu0 0.0
  %525 = vmatpush1.msra.mxu0 0.0
  %526 = vmatprep.subr.mxu0 0.0
  %527 = vmatpush1.msra.mxu0 0.0
  %528 = vmatprep.subr.mxu0 0.0
  %529 = vmatpush1.msra.mxu0 0.0
  %530 = vmatprep.subr.mxu0 0.0
  %531 = vmatpush1.msra.mxu0 0.0
  %532 = vmatprep.subr.mxu0 0.0
  %533 = vmatpush1.msra.mxu0 0.0
  %534 = vmatprep.subr.mxu0 0.0
  %535 = vmatpush1.msra.mxu0 0.0
  %536 = vmatprep.subr.mxu0 0.0
  %537 = vmatpush1.msra.mxu0 0.0
  %538 = vmatprep.subr.mxu0 0.0
  %539 = vmatpush1.msra.mxu0 0.0
  %540 = vmatprep.subr.mxu0 0.0
  %541 = vmatpush1.msra.mxu0 0.0
  %542 = vmatprep.subr.mxu0 0.0
  %543 = vmatpush1.msra.mxu0 0.0
  %544 = vmatprep.subr.mxu0 0.0
  %545 = vmatpush1.msra.mxu0 0.0
  %546 = vmatprep.subr.mxu0 0.0
  %547 = vmatpush1.msra.mxu0 0.0
  %548 = vmatprep.subr.mxu0 0.0
  %549 = vmatpush1.msra.mxu0 0.0
  %550 = vmatprep.subr.mxu0 0.0
  %551 = vmatpush1.msra.mxu0 0.0
  %552 = vmatprep.subr.mxu0 0.0
  %553 = vmatpush1.msra.mxu0 0.0
  %554 = vmatprep.mubr.f32.mxu0 0.0
  %555 = vmatmul.mubr.f32.gmra.mrb[0].mxu0 %v485
  %v556 = vpop.f32.mrb[0].mxu0
  %v557 = vadd.f32 0.0, %v556
  %v558 = vpop.f32.mrb[0].mxu0
  %559 = vmatprep.mubr.f32.mxu0 0.0
  %560 = vmatmul.mubr.f32.gmra.mrb[0].mxu0 %v488
  %v561 = vpop.f32.mrb[0].mxu0
  %v562 = vadd.f32 0.0, %v561
  %v563 = vpop.f32.mrb[0].mxu0
  %564 = vdwg.mxu0
  %v565 = vadd.f32 %v106, %v557
  %v566 = vadd.f32 %v111, %v562
  %v567 = vld [vmem:[%s1 + $0x170] sm:$0xff]
  %v568 = vld [vmem:[%s1 + $0x178] sm:$0xff]
  %v569 = vadd.f32 %v565, %v567
  %v570 = vadd.f32 %v566, %v568
  %v572 = vsel %vm114, %v569, 0
  %v575 = vsel %vm114, %v570, 0
  %577 = vmatprep.subr.mxu0 0.0
  %578 = vmatpush1.msra.mxu0 %v11
  %579 = vmatprep.subr.mxu0 0.0
  %580 = vmatpush1.msra.mxu0 %v12
  %581 = vmatprep.subr.mxu0 0.0
  %582 = vmatpush1.msra.mxu0 %v13
  %583 = vmatprep.subr.mxu0 0.0
  %584 = vmatpush1.msra.mxu0 %v14
  %585 = vmatprep.subr.mxu0 0.0
  %586 = vmatpush1.msra.mxu0 %v15
  %587 = vmatprep.subr.mxu0 0.0
  %588 = vmatpush1.msra.mxu0 %v16
  %589 = vmatprep.subr.mxu0 0.0
  %590 = vmatpush1.msra.mxu0 %v17
  %591 = vmatprep.subr.mxu0 0.0
  %592 = vmatpush1.msra.mxu0 %v18
  %593 = vmatprep.subr.mxu0 0.0
  %594 = vmatpush1.msra.mxu0 0.0
  %595 = vmatprep.subr.mxu0 0.0
  %596 = vmatpush1.msra.mxu0 0.0
  %597 = vmatprep.subr.mxu0 0.0
  %598 = vmatpush1.msra.mxu0 0.0
  %599 = vmatprep.subr.mxu0 0.0
  %600 = vmatpush1.msra.mxu0 0.0
  %601 = vmatprep.subr.mxu0 0.0
  %602 = vmatpush1.msra.mxu0 0.0
  %603 = vmatprep.subr.mxu0 0.0
  %604 = vmatpush1.msra.mxu0 0.0
  %605 = vmatprep.subr.mxu0 0.0
  %606 = vmatpush1.msra.mxu0 0.0
  %607 = vmatprep.subr.mxu0 0.0
  %608 = vmatpush1.msra.mxu0 0.0
  %609 = vmatprep.subr.mxu0 0.0
  %610 = vmatpush1.msra.mxu0 0.0
  %611 = vmatprep.subr.mxu0 0.0
  %612 = vmatpush1.msra.mxu0 0.0
  %613 = vmatprep.subr.mxu0 0.0
  %614 = vmatpush1.msra.mxu0 0.0
  %615 = vmatprep.subr.mxu0 0.0
  %616 = vmatpush1.msra.mxu0 0.0
  %617 = vmatprep.subr.mxu0 0.0
  %618 = vmatpush1.msra.mxu0 0.0
  %619 = vmatprep.subr.mxu0 0.0
  %620 = vmatpush1.msra.mxu0 0.0
  %621 = vmatprep.subr.mxu0 0.0
  %622 = vmatpush1.msra.mxu0 0.0
  %623 = vmatprep.subr.mxu0 0.0
  %624 = vmatpush1.msra.mxu0 0.0
  %625 = vmatprep.subr.mxu0 0.0
  %626 = vmatpush1.msra.mxu0 0.0
  %627 = vmatprep.subr.mxu0 0.0
  %628 = vmatpush1.msra.mxu0 0.0
  %629 = vmatprep.subr.mxu0 0.0
  %630 = vmatpush1.msra.mxu0 0.0
  %631 = vmatprep.subr.mxu0 0.0
  %632 = vmatpush1.msra.mxu0 0.0
  %633 = vmatprep.subr.mxu0 0.0
  %634 = vmatpush1.msra.mxu0 0.0
  %635 = vmatprep.subr.mxu0 0.0
  %636 = vmatpush1.msra.mxu0 0.0
  %637 = vmatprep.subr.mxu0 0.0
  %638 = vmatpush1.msra.mxu0 0.0
  %639 = vmatprep.subr.mxu0 0.0
  %640 = vmatpush1.msra.mxu0 0.0
  %641 = vmatprep.mubr.f32.mxu0 0.0
  %642 = vmatmul.mubr.f32.gmra.mrb[0].mxu0 %v572
  %v643 = vpop.f32.mrb[0].mxu0
  %v644 = vadd.f32 0.0, %v643
  %v645 = vpop.f32.mrb[0].mxu0
  %646 = vmatprep.mubr.f32.mxu0 0.0
  %647 = vmatmul.mubr.f32.gmra.mrb[0].mxu0 %v575
  %v648 = vpop.f32.mrb[0].mxu0
  %v649 = vadd.f32 0.0, %v648
  %v650 = vpop.f32.mrb[0].mxu0
  %651 = vdwg.mxu0
  %v652 = vmul.f32 %v569, %v569
  %v653 = vmul.f32 %v570, %v570
  %v655 = vsel %vm114, %v652, 0
  %v658 = vsel %vm114, %v653, 0
  %660 = vmatprep.subr.mxu0 0.0
  %661 = vmatpush1.msra.mxu0 %v11
  %662 = vmatprep.subr.mxu0 0.0
  %663 = vmatpush1.msra.mxu0 %v12
  %664 = vmatprep.subr.mxu0 0.0
  %665 = vmatpush1.msra.mxu0 %v13
  %666 = vmatprep.subr.mxu0 0.0
  %667 = vmatpush1.msra.mxu0 %v14
  %668 = vmatprep.subr.mxu0 0.0
  %669 = vmatpush1.msra.mxu0 %v15
  %670 = vmatprep.subr.mxu0 0.0
  %671 = vmatpush1.msra.mxu0 %v16
  %672 = vmatprep.subr.mxu0 0.0
  %673 = vmatpush1.msra.mxu0 %v17
  %674 = vmatprep.subr.mxu0 0.0
  %675 = vmatpush1.msra.mxu0 %v18
  %676 = vmatprep.subr.mxu0 0.0
  %677 = vmatpush1.msra.mxu0 0.0
  %678 = vmatprep.subr.mxu0 0.0
  %679 = vmatpush1.msra.mxu0 0.0
  %680 = vmatprep.subr.mxu0 0.0
  %681 = vmatpush1.msra.mxu0 0.0
  %682 = vmatprep.subr.mxu0 0.0
  %683 = vmatpush1.msra.mxu0 0.0
  %684 = vmatprep.subr.mxu0 0.0
  %685 = vmatpush1.msra.mxu0 0.0
  %686 = vmatprep.subr.mxu0 0.0
  %687 = vmatpush1.msra.mxu0 0.0
  %688 = vmatprep.subr.mxu0 0.0
  %689 = vmatpush1.msra.mxu0 0.0
  %690 = vmatprep.subr.mxu0 0.0
  %691 = vmatpush1.msra.mxu0 0.0
  %692 = vmatprep.subr.mxu0 0.0
  %693 = vmatpush1.msra.mxu0 0.0
  %694 = vmatprep.subr.mxu0 0.0
  %695 = vmatpush1.msra.mxu0 0.0
  %696 = vmatprep.subr.mxu0 0.0
  %697 = vmatpush1.msra.mxu0 0.0
  %698 = vmatprep.subr.mxu0 0.0
  %699 = vmatpush1.msra.mxu0 0.0
  %700 = vmatprep.subr.mxu0 0.0
  %701 = vmatpush1.msra.mxu0 0.0
  %702 = vmatprep.subr.mxu0 0.0
  %703 = vmatpush1.msra.mxu0 0.0
  %704 = vmatprep.subr.mxu0 0.0
  %705 = vmatpush1.msra.mxu0 0.0
  %706 = vmatprep.subr.mxu0 0.0
  %707 = vmatpush1.msra.mxu0 0.0
  %708 = vmatprep.subr.mxu0 0.0
  %709 = vmatpush1.msra.mxu0 0.0
  %710 = vmatprep.subr.mxu0 0.0
  %711 = vmatpush1.msra.mxu0 0.0
  %712 = vmatprep.subr.mxu0 0.0
  %713 = vmatpush1.msra.mxu0 0.0
  %714 = vmatprep.subr.mxu0 0.0
  %715 = vmatpush1.msra.mxu0 0.0
  %716 = vmatprep.subr.mxu0 0.0
  %717 = vmatpush1.msra.mxu0 0.0
  %718 = vmatprep.subr.mxu0 0.0
  %719 = vmatpush1.msra.mxu0 0.0
  %720 = vmatprep.subr.mxu0 0.0
  %721 = vmatpush1.msra.mxu0 0.0
  %722 = vmatprep.subr.mxu0 0.0
  %723 = vmatpush1.msra.mxu0 0.0
  %724 = vmatprep.mubr.f32.mxu0 0.0
  %725 = vmatmul.mubr.f32.gmra.mrb[0].mxu0 %v655
  %v726 = vpop.f32.mrb[0].mxu0
  %v727 = vadd.f32 0.0, %v726
  %v728 = vpop.f32.mrb[0].mxu0
  %729 = vmatprep.mubr.f32.mxu0 0.0
  %730 = vmatmul.mubr.f32.gmra.mrb[0].mxu0 %v658
  %v731 = vpop.f32.mrb[0].mxu0
  %v732 = vadd.f32 0.0, %v731
  %v733 = vpop.f32.mrb[0].mxu0
  %734 = vdwg.mxu0
  %v735 = vsub.f32 %v569, %v644
  %v736 = vsub.f32 %v570, %v649
  %v737 = vmul.f32 %v644, %v644
  %v738 = vmul.f32 %v649, %v649
  %v739 = vsub.f32 %v727, %v737
  %v740 = vsub.f32 %v732, %v738
  %v741 = vadd.f32 %v739, 1e-05
  %v742 = vadd.f32 %v740, 1e-05
  %v743 = vrsqrt.pop %v741
  %v744 = vrsqrt.pop %v742
  %v745 = vmul.f32 %v735, %v743
  %v746 = vmul.f32 %v736, %v744
  %v747 = vld [vmem:[%s1 + $0x180] sm:$0xff]
  %v748 = vld [vmem:[%s1 + $0x188] sm:$0xff]
  %v749 = vld [vmem:[%s1 + $0x190] sm:$0xff]
  %v750 = vld [vmem:[%s1 + $0x198] sm:$0xff]
  %v751 = vld [vmem:[%s1 + $0x1a0] sm:$0xff]
  %v752 = vld [vmem:[%s1 + $0x1a8] sm:$0xff]
  %v753 = vld [vmem:[%s1 + $0x1b0] sm:$0xff]
  %v754 = vld [vmem:[%s1 + $0x1b8] sm:$0xff]
  %v755 = vld [vmem:[%s1 + $0x1c0] sm:$0xff]
  %v756 = vld [vmem:[%s1 + $0x1c8] sm:$0xff]
  %v758 = vsel %vm114, %v745, 0
  %v761 = vsel %vm114, %v746, 0
  %763 = vmatprep.subr.mxu0 0.0
  %764 = vmatpush1.msra.mxu0 %v747
  %765 = vmatprep.subr.mxu0 0.0
  %766 = vmatpush1.msra.mxu0 %v748
  %767 = vmatprep.subr.mxu0 0.0
  %768 = vmatpush1.msra.mxu0 %v749
  %769 = vmatprep.subr.mxu0 0.0
  %770 = vmatpush1.msra.mxu0 %v750
  %771 = vmatprep.subr.mxu0 0.0
  %772 = vmatpush1.msra.mxu0 %v751
  %773 = vmatprep.subr.mxu0 0.0
  %774 = vmatpush1.msra.mxu0 %v752
  %775 = vmatprep.subr.mxu0 0.0
  %776 = vmatpush1.msra.mxu0 %v753
  %777 = vmatprep.subr.mxu0 0.0
  %778 = vmatpush1.msra.mxu0 %v754
  %779 = vmatprep.subr.mxu0 0.0
  %780 = vmatpush1.msra.mxu0 0.0
  %781 = vmatprep.subr.mxu0 0.0
  %782 = vmatpush1.msra.mxu0 0.0
  %783 = vmatprep.subr.mxu0 0.0
  %784 = vmatpush1.msra.mxu0 0.0
  %785 = vmatprep.subr.mxu0 0.0
  %786 = vmatpush1.msra.mxu0 0.0
  %787 = vmatprep.subr.mxu0 0.0
  %788 = vmatpush1.msra.mxu0 0.0
  %789 = vmatprep.subr.mxu0 0.0
  %790 = vmatpush1.msra.mxu0 0.0
  %791 = vmatprep.subr.mxu0 0.0
  %792 = vmatpush1.msra.mxu0 0.0
  %793 = vmatprep.subr.mxu0 0.0
  %794 = vmatpush1.msra.mxu0 0.0
  %795 = vmatprep.subr.mxu0 0.0
  %796 = vmatpush1.msra.mxu0 0.0
  %797 = vmatprep.subr.mxu0 0.0
  %798 = vmatpush1.msra.mxu0 0.0
  %799 = vmatprep.subr.mxu0 0.0
  %800 = vmatpush1.msra.mxu0 0.0
  %801 = vmatprep.subr.mxu0 0.0
  %802 = vmatpush1.msra.mxu0 0.0
  %803 = vmatprep.subr.mxu0 0.0
  %804 = vmatpush1.msra.mxu0 0.0
  %805 = vmatprep.subr.mxu0 0.0
  %806 = vmatpush1.msra.mxu0 0.0
  %807 = vmatprep.subr.mxu0 0.0
  %808 = vmatpush1.msra.mxu0 0.0
  %809 = vmatprep.subr.mxu0 0.0
  %810 = vmatpush1.msra.mxu0 0.0
  %811 = vmatprep.subr.mxu0 0.0
  %812 = vmatpush1.msra.mxu0 0.0
  %813 = vmatprep.subr.mxu0 0.0
  %814 = vmatpush1.msra.mxu0 0.0
  %815 = vmatprep.subr.mxu0 0.0
  %816 = vmatpush1.msra.mxu0 0.0
  %817 = vmatprep.subr.mxu0 0.0
  %818 = vmatpush1.msra.mxu0 0.0
  %819 = vmatprep.subr.mxu0 0.0
  %820 = vmatpush1.msra.mxu0 0.0
  %821 = vmatprep.subr.mxu0 0.0
  %822 = vmatpush1.msra.mxu0 0.0
  %823 = vmatprep.subr.mxu0 0.0
  %824 = vmatpush1.msra.mxu0 0.0
  %825 = vmatprep.subr.mxu0 0.0
  %826 = vmatpush1.msra.mxu0 0.0
  %827 = vmatprep.mubr.f32.mxu0 0.0
  %828 = vmatmul.mubr.f32.gmra.mrb[0].mxu0 %v758
  %v829 = vpop.f32.mrb[0].mxu0
  %v830 = vadd.f32 %v755, %v829
  %v831 = vpop.f32.mrb[0].mxu0
  %832 = vmatprep.mubr.f32.mxu0 0.0
  %833 = vmatmul.mubr.f32.gmra.mrb[0].mxu0 %v761
  %v834 = vpop.f32.mrb[0].mxu0
  %v835 = vadd.f32 %v756, %v834
  %v836 = vpop.f32.mrb[0].mxu0
  %837 = vdwg.mxu0
  %v838 = vmul.f32 %v830, 0.5
  %v839 = vmul.f32 %v835, 0.5
  %v840 = vmul.f32 %v830, %v449
  %v841 = vmul.f32 %v835, %v449
  %v842 = verf.f32.pop %v840
  %v843 = verf.f32.pop %v841
  %v844 = vadd.f32 %v842, 1.0
  %v845 = vadd.f32 %v843, 1.0
  %v846 = vmul.f32 %v838, %v844
  %v847 = vmul.f32 %v839, %v845
  %v848 = vld [vmem:[%s1 + $0x1d0] sm:$0xff]
  %v849 = vld [vmem:[%s1 + $0x1d8] sm:$0xff]
  %v850 = vld [vmem:[%s1 + $0x1e0] sm:$0xff]
  %v851 = vld [vmem:[%s1 + $0x1e8] sm:$0xff]
  %vm852 = vcmask 261120
  %v854 = vsel %vm852, %v846, 0
  %v857 = vsel %vm852, %v847, 0
  %859 = vmatprep.subr.mxu0 0.0
  %860 = vmatpush1.msra.mxu0 %v848
  %861 = vmatprep.subr.mxu0 0.0
  %862 = vmatpush1.msra.mxu0 %v849
  %863 = vmatprep.subr.mxu0 0.0
  %864 = vmatpush1.msra.mxu0 %v850
  %865 = vmatprep.subr.mxu0 0.0
  %866 = vmatpush1.msra.mxu0 %v851
  %867 = vmatprep.subr.mxu0 0.0
  %868 = vmatpush1.msra.mxu0 0.0
  %869 = vmatprep.subr.mxu0 0.0
  %870 = vmatpush1.msra.mxu0 0.0
  %871 = vmatprep.subr.mxu0 0.0
  %872 = vmatpush1.msra.mxu0 0.0
  %873 = vmatprep.subr.mxu0 0.0
  %874 = vmatpush1.msra.mxu0 0.0
  %875 = vmatprep.subr.mxu0 0.0
  %876 = vmatpush1.msra.mxu0 0.0
  %877 = vmatprep.subr.mxu0 0.0
  %878 = vmatpush1.msra.mxu0 0.0
  %879 = vmatprep.subr.mxu0 0.0
  %880 = vmatpush1.msra.mxu0 0.0
  %881 = vmatprep.subr.mxu0 0.0
  %882 = vmatpush1.msra.mxu0 0.0
  %883 = vmatprep.subr.mxu0 0.0
  %884 = vmatpush1.msra.mxu0 0.0
  %885 = vmatprep.subr.mxu0 0.0
  %886 = vmatpush1.msra.mxu0 0.0
  %887 = vmatprep.subr.mxu0 0.0
  %888 = vmatpush1.msra.mxu0 0.0
  %889 = vmatprep.subr.mxu0 0.0
  %890 = vmatpush1.msra.mxu0 0.0
  %891 = vmatprep.subr.mxu0 0.0
  %892 = vmatpush1.msra.mxu0 0.0
  %893 = vmatprep.subr.mxu0 0.0
  %894 = vmatpush1.msra.mxu0 0.0
  %895 = vmatprep.subr.mxu0 0.0
  %896 = vmatpush1.msra.mxu0 0.0
  %897 = vmatprep.subr.mxu0 0.0
  %898 = vmatpush1.msra.mxu0 0.0
  %899 = vmatprep.subr.mxu0 0.0
  %900 = vmatpush1.msra.mxu0 0.0
  %901 = vmatprep.subr.mxu0 0.0
  %902 = vmatpush1.msra.mxu0 0.0
  %903 = vmatprep.subr.mxu0 0.0
  %904 = vmatpush1.msra.mxu0 0.0
  %905 = vmatprep.subr.mxu0 0.0
  %906 = vmatpush1.msra.mxu0 0.0
  %907 = vmatprep.subr.mxu0 0.0
  %908 = vmatpush1.msra.mxu0 0.0
  %909 = vmatprep.subr.mxu0 0.0
  %910 = vmatpush1.msra.mxu0 0.0
  %911 = vmatprep.subr.mxu0 0.0
  %912 = vmatpush1.msra.mxu0 0.0
  %913 = vmatprep.subr.mxu0 0.0
  %914 = vmatpush1.msra.mxu0 0.0
  %915 = vmatprep.subr.mxu0 0.0
  %916 = vmatpush1.msra.mxu0 0.0
  %917 = vmatprep.subr.mxu0 0.0
  %918 = vmatpush1.msra.mxu0 0.0
  %919 = vmatprep.subr.mxu0 0.0
  %920 = vmatpush1.msra.mxu0 0.0
  %921 = vmatprep.subr.mxu0 0.0
  %922 = vmatpush1.msra.mxu0 0.0
  %923 = vmatprep.mubr.f32.mxu0 0.0
  %924 = vmatmul.mubr.f32.gmra.mrb[0].mxu0 %v854
  %v925 = vpop.f32.mrb[0].mxu0
  %v926 = vadd.f32 0.0, %v925
  %v927 = vpop.f32.mrb[0].mxu0
  %928 = vmatprep.mubr.f32.mxu0 0.0
  %929 = vmatmul.mubr.f32.gmra.mrb[0].mxu0 %v857
  %v930 = vpop.f32.mrb[0].mxu0
  %v931 = vadd.f32 0.0, %v930
  %v932 = vpop.f32.mrb[0].mxu0
  %933 = vdwg.mxu0
  %v934 = vadd.f32 %v569, %v926
  %v935 = vadd.f32 %v570, %v931
  %v936 = vld [vmem:[%s1 + $0x1f0] sm:$0xff]
  %v937 = vld [vmem:[%s1 + $0x1f8] sm:$0xff]
  %v938 = vadd.f32 %v934, %v936
  %v939 = vadd.f32 %v935, %v937
  %v941 = vsel %vm114, %v938, 0
  %v944 = vsel %vm114, %v939, 0
  %946 = vmatprep.subr.mxu0 0.0
  %947 = vmatpush1.msra.mxu0 %v11
  %948 = vmatprep.subr.mxu0 0.0
  %949 = vmatpush1.msra.mxu0 %v12
  %950 = vmatprep.subr.mxu0 0.0
  %951 = vmatpush1.msra.mxu0 %v13
  %952 = vmatprep.subr.mxu0 0.0
  %953 = vmatpush1.msra.mxu0 %v14
  %954 = vmatprep.subr.mxu0 0.0
  %955 = vmatpush1.msra.mxu0 %v15
  %956 = vmatprep.subr.mxu0 0.0
  %957 = vmatpush1.msra.mxu0 %v16
  %958 = vmatprep.subr.mxu0 0.0
  %959 = vmatpush1.msra.mxu0 %v17
  %960 = vmatprep.subr.mxu0 0.0
  %961 = vmatpush1.msra.mxu0 %v18
  %962 = vmatprep.subr.mxu0 0.0
  %963 = vmatpush1.msra.mxu0 0.0
  %964 = vmatprep.subr.mxu0 0.0
  %965 = vmatpush1.msra.mxu0 0.0
  %966 = vmatprep.subr.mxu0 0.0
  %967 = vmatpush1.msra.mxu0 0.0
  %968 = vmatprep.subr.mxu0 0.0
  %969 = vmatpush1.msra.mxu0 0.0
  %970 = vmatprep.subr.mxu0 0.0
  %971 = vmatpush1.msra.mxu0 0.0
  %972 = vmatprep.subr.mxu0 0.0
  %973 = vmatpush1.msra.mxu0 0.0
  %974 = vmatprep.subr.mxu0 0.0
  %975 = vmatpush1.msra.mxu0 0.0
  %976 = vmatprep.subr.mxu0 0.0
  %977 = vmatpush1.msra.mxu0 0.0
  %978 = vmatprep.subr.mxu0 0.0
  %979 = vmatpush1.msra.mxu0 0.0
  %980 = vmatprep.subr.mxu0 0.0
  %981 = vmatpush1.msra.mxu0 0.0
  %982 = vmatprep.subr.mxu0 0.0
  %983 = vmatpush1.msra.mxu0 0.0
  %984 = vmatprep.subr.mxu0 0.0
  %985 = vmatpush1.msra.mxu0 0.0
  %986 = vmatprep.subr.mxu0 0.0
  %987 = vmatpush1.msra.mxu0 0.0
  %988 = vmatprep.subr.mxu0 0.0
  %989 = vmatpush1.msra.mxu0 0.0
  %990 = vmatprep.subr.mxu0 0.0
  %991 = vmatpush1.msra.mxu0 0.0
  %992 = vmatprep.subr.mxu0 0.0
  %993 = vmatpush1.msra.mxu0 0.0
  %994 = vmatprep.subr.mxu0 0.0
  %995 = vmatpush1.msra.mxu0 0.0
  %996 = vmatprep.subr.mxu0 0.0
  %997 = vmatpush1.msra.mxu0 0.0
  %998 = vmatprep.subr.mxu0 0.0
  %999 = vmatpush1.msra.mxu0 0.0
  %1000 = vmatprep.subr.mxu0 0.0
  %1001 = vmatpush1.msra.mxu0 0.0
  %1002 = vmatprep.subr.mxu0 0.0
  %1003 = vmatpush1.msra.mxu0 0.0
  %1004 = vmatprep.subr.mxu0 0.0
  %1005 = vmatpush1.msra.mxu0 0.0
  %1006 = vmatprep.subr.mxu0 0.0
  %1007 = vmatpush1.msra.mxu0 0.0
  %1008 = vmatprep.subr.mxu0 0.0
  %1009 = vmatpush1.msra.mxu0 0.0
  %1010 = vmatprep.mubr.f32.mxu0 0.0
  %1011 = vmatmul.mubr.f32.gmra.mrb[0].mxu0 %v941
  %v1012 = vpop.f32.mrb[0].mxu0
  %v1013 = vadd.f32 0.0, %v1012
  %v1014 = vpop.f32.mrb[0].mxu0
  %1015 = vmatprep.mubr.f32.mxu0 0.0
  %1016 = vmatmul.mubr.f32.gmra.mrb[0].mxu0 %v944
  %v1017 = vpop.f32.mrb[0].mxu0
  %v1018 = vadd.f32 0.0, %v1017
  %v1019 = vpop.f32.mrb[0].mxu0
  %1020 = vdwg.mxu0
  %v1021 = vmul.f32 %v938, %v938
  %v1022 = vmul.f32 %v939, %v939
  %v1024 = vsel %vm114, %v1021, 0
  %v1027 = vsel %vm114, %v1022, 0
  %1029 = vmatprep.subr.mxu0 0.0
  %1030 = vmatpush1.msra.mxu0 %v11
  %1031 = vmatprep.subr.mxu0 0.0
  %1032 = vmatpush1.msra.mxu0 %v12
  %1033 = vmatprep.subr.mxu0 0.0
  %1034 = vmatpush1.msra.mxu0 %v13
  %1035 = vmatprep.subr.mxu0 0.0
  %1036 = vmatpush1.msra.mxu0 %v14
  %1037 = vmatprep.subr.mxu0 0.0
  %1038 = vmatpush1.msra.mxu0 %v15
  %1039 = vmatprep.subr.mxu0 0.0
  %1040 = vmatpush1.msra.mxu0 %v16
  %1041 = vmatprep.subr.mxu0 0.0
  %1042 = vmatpush1.msra.mxu0 %v17
  %1043 = vmatprep.subr.mxu0 0.0
  %1044 = vmatpush1.msra.mxu0 %v18
  %1045 = vmatprep.subr.mxu0 0.0
  %1046 = vmatpush1.msra.mxu0 0.0
  %1047 = vmatprep.subr.mxu0 0.0
  %1048 = vmatpush1.msra.mxu0 0.0
  %1049 = vmatprep.subr.mxu0 0.0
  %1050 = vmatpush1.msra.mxu0 0.0
  %1051 = vmatprep.subr.mxu0 0.0
  %1052 = vmatpush1.msra.mxu0 0.0
  %1053 = vmatprep.subr.mxu0 0.0
  %1054 = vmatpush1.msra.mxu0 0.0
  %1055 = vmatprep.subr.mxu0 0.0
  %1056 = vmatpush1.msra.mxu0 0.0
  %1057 = vmatprep.subr.mxu0 0.0
  %1058 = vmatpush1.msra.mxu0 0.0
  %1059 = vmatprep.subr.mxu0 0.0
  %1060 = vmatpush1.msra.mxu0 0.0
  %1061 = vmatprep.subr.mxu0 0.0
  %1062 = vmatpush1.msra.mxu0 0.0
  %1063 = vmatprep.subr.mxu0 0.0
  %1064 = vmatpush1.msra.mxu0 0.0
  %1065 = vmatprep.subr.mxu0 0.0
  %1066 = vmatpush1.msra.mxu0 0.0
  %1067 = vmatprep.subr.mxu0 0.0
  %1068 = vmatpush1.msra.mxu0 0.0
  %1069 = vmatprep.subr.mxu0 0.0
  %1070 = vmatpush1.msra.mxu0 0.0
  %1071 = vmatprep.subr.mxu0 0.0
  %1072 = vmatpush1.msra.mxu0 0.0
  %1073 = vmatprep.subr.mxu0 0.0
  %1074 = vmatpush1.msra.mxu0 0.0
  %1075 = vmatprep.subr.mxu0 0.0
  %1076 = vmatpush1.msra.mxu0 0.0
  %1077 = vmatprep.subr.mxu0 0.0
  %1078 = vmatpush1.msra.mxu0 0.0
  %1079 = vmatprep.subr.mxu0 0.0
  %1080 = vmatpush1.msra.mxu0 0.0
  %1081 = vmatprep.subr.mxu0 0.0
  %1082 = vmatpush1.msra.mxu0 0.0
  %1083 = vmatprep.subr.mxu0 0.0
  %1084 = vmatpush1.msra.mxu0 0.0
  %1085 = vmatprep.subr.mxu0 0.0
  %1086 = vmatpush1.msra.mxu0 0.0
  %1087 = vmatprep.subr.mxu0 0.0
  %1088 = vmatpush1.msra.mxu0 0.0
  %1089 = vmatprep.subr.mxu0 0.0
  %1090 = vmatpush1.msra.mxu0 0.0
  %1091 = vmatprep.subr.mxu0 0.0
  %1092 = vmatpush1.msra.mxu0 0.0
  %1093 = vmatprep.mubr.f32.mxu0 0.0
  %1094 = vmatmul.mubr.f32.gmra.mrb[0].mxu0 %v1024
  %v1095 = vpop.f32.mrb[0].mxu0
  %v1096 = vadd.f32 0.0, %v1095
  %v1097 = vpop.f32.mrb[0].mxu0
  %1098 = vmatprep.mubr.f32.mxu0 0.0
  %1099 = vmatmul.mubr.f32.gmra.mrb[0].mxu0 %v1027
  %v1100 = vpop.f32.mrb[0].mxu0
  %v1101 = vadd.f32 0.0, %v1100
  %v1102 = vpop.f32.mrb[0].mxu0
  %1103 = vdwg.mxu0
  %v1104 = vsub.f32 %v938, %v1013
  %v1105 = vsub.f32 %v939, %v1018
  %v1106 = vmul.f32 %v1013, %v1013
  %v1107 = vmul.f32 %v1018, %v1018
  %v1108 = vsub.f32 %v1096, %v1106
  %v1109 = vsub.f32 %v1101, %v1107
  %v1110 = vadd.f32 %v1108, 1e-05
  %v1111 = vadd.f32 %v1109, 1e-05
  %v1112 = vrsqrt.pop %v1110
  %v1113 = vrsqrt.pop %v1111
  %v1114 = vmul.f32 %v1104, %v1112
  %v1115 = vmul.f32 %v1105, %v1113
  %v1116 = vld [vmem:[%s1 + $0x200] sm:$0xff]
  %v1117 = vld [vmem:[%s1 + $0x208] sm:$0xff]
  %v1118 = vmul.f32 %v1114, %v1116
  %v1119 = vmul.f32 %v1115, %v1117
  %v1120 = vld [vmem:[%s1 + $0x210] sm:$0xff]
  %v1121 = vld [vmem:[%s1 + $0x218] sm:$0xff]
  %v1122 = vld [vmem:[%s1 + $0x220] sm:$0xff]
  %v1123 = vld [vmem:[%s1 + $0x228] sm:$0xff]
  %v1124 = vld [vmem:[%s1 + $0x230] sm:$0xff]
  %v1125 = vld [vmem:[%s1 + $0x238] sm:$0xff]
  %v1126 = vld [vmem:[%s1 + $0x240] sm:$0xff]
  %v1127 = vld [vmem:[%s1 + $0x248] sm:$0xff]
  %v1128 = vld [vmem:[%s1 + $0x250] sm:$0xff]
  %v1129 = vld [vmem:[%s1 + $0x258] sm:$0xff]
  %v1130 = vld [vmem:[%s1 + $0x260] sm:$0xff]
  %v1131 = vld [vmem:[%s1 + $0x268] sm:$0xff]
  %v1132 = vld [vmem:[%s1 + $0x270] sm:$0xff]
  %v1133 = vld [vmem:[%s1 + $0x278] sm:$0xff]
  %v1134 = vld [vmem:[%s1 + $0x280] sm:$0xff]
  %v1135 = vld [vmem:[%s1 + $0x288] sm:$0xff]
  %v1137 = vsel %vm311, %v1120, 0
  %v1140 = vsel %vm311, %v1121, 0
  %v1143 = vsel %vm311, %v1122, 0
  %v1146 = vsel %vm311, %v1123, 0
  %v1149 = vsel %vm311, %v1124, 0
  %v1152 = vsel %vm311, %v1125, 0
  %v1155 = vsel %vm311, %v1126, 0
  %v1158 = vsel %vm311, %v1127, 0
  %1160 = vmatprep.subr.mxu0 0.0
  %1161 = vmatpush1.msra.mxu0 %v1118
  %1162 = vmatprep.subr.mxu0 0.0
  %1163 = vmatpush1.msra.mxu0 %v1119
  %1164 = vmatprep.subr.mxu0 0.0
  %1165 = vmatpush1.msra.mxu0 0.0
  %1166 = vmatprep.subr.mxu0 0.0
  %1167 = vmatpush1.msra.mxu0 0.0
  %1168 = vmatprep.subr.mxu0 0.0
  %1169 = vmatpush1.msra.mxu0 0.0
  %1170 = vmatprep.subr.mxu0 0.0
  %1171 = vmatpush1.msra.mxu0 0.0
  %1172 = vmatprep.subr.mxu0 0.0
  %1173 = vmatpush1.msra.mxu0 0.0
  %1174 = vmatprep.subr.mxu0 0.0
  %1175 = vmatpush1.msra.mxu0 0.0
  %1176 = vmatprep.subr.mxu0 0.0
  %1177 = vmatpush1.msra.mxu0 0.0
  %1178 = vmatprep.subr.mxu0 0.0
  %1179 = vmatpush1.msra.mxu0 0.0
  %1180 = vmatprep.subr.mxu0 0.0
  %1181 = vmatpush1.msra.mxu0 0.0
  %1182 = vmatprep.subr.mxu0 0.0
  %1183 = vmatpush1.msra.mxu0 0.0
  %1184 = vmatprep.subr.mxu0 0.0
  %1185 = vmatpush1.msra.mxu0 0.0
  %1186 = vmatprep.subr.mxu0 0.0
  %1187 = vmatpush1.msra.mxu0 0.0
  %1188 = vmatprep.subr.mxu0 0.0
  %1189 = vmatpush1.msra.mxu0 0.0
  %1190 = vmatprep.subr.mxu0 0.0
  %1191 = vmatpush1.msra.mxu0 0.0
  %1192 = vmatprep.subr.mxu0 0.0
  %1193 = vmatpush1.msra.mxu0 0.0
  %1194 = vmatprep.subr.mxu0 0.0
  %1195 = vmatpush1.msra.mxu0 0.0
  %1196 = vmatprep.subr.mxu0 0.0
  %1197 = vmatpush1.msra.mxu0 0.0
  %1198 = vmatprep.subr.mxu0 0.0
  %1199 = vmatpush1.msra.mxu0 0.0
  %1200 = vmatprep.subr.mxu0 0.0
  %1201 = vmatpush1.msra.mxu0 0.0
  %1202 = vmatprep.subr.mxu0 0.0
  %1203 = vmatpush1.msra.mxu0 0.0
  %1204 = vmatprep.subr.mxu0 0.0
  %1205 = vmatpush1.msra.mxu0 0.0
  %1206 = vmatprep.subr.mxu0 0.0
  %1207 = vmatpush1.msra.mxu0 0.0
  %1208 = vmatprep.subr.mxu0 0.0
  %1209 = vmatpush1.msra.mxu0 0.0
  %1210 = vmatprep.subr.mxu0 0.0
  %1211 = vmatpush1.msra.mxu0 0.0
  %1212 = vmatprep.subr.mxu0 0.0
  %1213 = vmatpush1.msra.mxu0 0.0
  %1214 = vmatprep.subr.mxu0 0.0
  %1215 = vmatpush1.msra.mxu0 0.0
  %1216 = vmatprep.subr.mxu0 0.0
  %1217 = vmatpush1.msra.mxu0 0.0
  %1218 = vmatprep.subr.mxu0 0.0
  %1219 = vmatpush1.msra.mxu0 0.0
  %1220 = vmatprep.subr.mxu0 0.0
  %1221 = vmatpush1.msra.mxu0 0.0
  %1222 = vmatprep.subr.mxu0 0.0
  %1223 = vmatpush1.msra.mxu0 0.0
  %1224 = vmatprep.mubr.f32.mxu0 0.0
  %1225 = vmatmul.mubr.f32.gmra.mrb[0].mxu0 %v1137
  %v1226 = vpop.f32.mrb[0].mxu0
  %v1227 = vadd.f32 %v1128, %v1226
  %v1228 = vpop.f32.mrb[0].mxu0
  %1229 = vmatprep.mubr.f32.mxu0 0.0
  %1230 = vmatmul.mubr.f32.gmra.mrb[0].mxu0 %v1140
  %v1231 = vpop.f32.mrb[0].mxu0
  %v1232 = vadd.f32 %v1129, %v1231
  %v1233 = vpop.f32.mrb[0].mxu0
  %1234 = vmatprep.mubr.f32.mxu0 0.0
  %1235 = vmatmul.mubr.f32.gmra.mrb[0].mxu0 %v1143
  %v1236 = vpop.f32.mrb[0].mxu0
  %v1237 = vadd.f32 %v1130, %v1236
  %v1238 = vpop.f32.mrb[0].mxu0
  %1239 = vmatprep.mubr.f32.mxu0 0.0
  %1240 = vmatmul.mubr.f32.gmra.mrb[0].mxu0 %v1146
  %v1241 = vpop.f32.mrb[0].mxu0
  %v1242 = vadd.f32 %v1131, %v1241
  %v1243 = vpop.f32.mrb[0].mxu0
  %1244 = vmatprep.mubr.f32.mxu0 0.0
  %1245 = vmatmul.mubr.f32.gmra.mrb[0].mxu0 %v1149
  %v1246 = vpop.f32.mrb[0].mxu0
  %v1247 = vadd.f32 %v1132, %v1246
  %v1248 = vpop.f32.mrb[0].mxu0
  %1249 = vmatprep.mubr.f32.mxu0 0.0
  %1250 = vmatmul.mubr.f32.gmra.mrb[0].mxu0 %v1152
  %v1251 = vpop.f32.mrb[0].mxu0
  %v1252 = vadd.f32 %v1133, %v1251
  %v1253 = vpop.f32.mrb[0].mxu0
  %1254 = vmatprep.mubr.f32.mxu0 0.0
  %1255 = vmatmul.mubr.f32.gmra.mrb[0].mxu0 %v1155
  %v1256 = vpop.f32.mrb[0].mxu0
  %v1257 = vadd.f32 %v1134, %v1256
  %v1258 = vpop.f32.mrb[0].mxu0
  %1259 = vmatprep.mubr.f32.mxu0 0.0
  %1260 = vmatmul.mubr.f32.gmra.mrb[0].mxu0 %v1158
  %v1261 = vpop.f32.mrb[0].mxu0
  %v1262 = vadd.f32 %v1135, %v1261
  %v1263 = vpop.f32.mrb[0].mxu0
  %1264 = vdwg.mxu0
  %v1265 = vmul.f32 %v1227, 0.5
  %v1266 = vmul.f32 %v1232, 0.5
  %v1267 = vmul.f32 %v1237, 0.5
  %v1268 = vmul.f32 %v1242, 0.5
  %v1269 = vmul.f32 %v1247, 0.5
  %v1270 = vmul.f32 %v1252, 0.5
  %v1271 = vmul.f32 %v1257, 0.5
  %v1272 = vmul.f32 %v1262, 0.5
  %v1273 = vmul.f32 %v1227, %v449
  %v1274 = vmul.f32 %v1232, %v449
  %v1275 = vmul.f32 %v1237, %v449
  %v1276 = vmul.f32 %v1242, %v449
  %v1277 = vmul.f32 %v1247, %v449
  %v1278 = vmul.f32 %v1252, %v449
  %v1279 = vmul.f32 %v1257, %v449
  %v1280 = vmul.f32 %v1262, %v449
  %v1281 = verf.f32.pop %v1273
  %v1282 = verf.f32.pop %v1274
  %v1283 = verf.f32.pop %v1275
  %v1284 = verf.f32.pop %v1276
  %v1285 = verf.f32.pop %v1277
  %v1286 = verf.f32.pop %v1278
  %v1287 = verf.f32.pop %v1279
  %v1288 = verf.f32.pop %v1280
  %v1289 = vadd.f32 %v1281, 1.0
  %v1290 = vadd.f32 %v1282, 1.0
  %v1291 = vadd.f32 %v1283, 1.0
  %v1292 = vadd.f32 %v1284, 1.0
  %v1293 = vadd.f32 %v1285, 1.0
  %v1294 = vadd.f32 %v1286, 1.0
  %v1295 = vadd.f32 %v1287, 1.0
  %v1296 = vadd.f32 %v1288, 1.0
  %v1297 = vmul.f32 %v1265, %v1289
  %v1298 = vmul.f32 %v1266, %v1290
  %v1299 = vmul.f32 %v1267, %v1291
  %v1300 = vmul.f32 %v1268, %v1292
  %v1301 = vmul.f32 %v1269, %v1293
  %v1302 = vmul.f32 %v1270, %v1294
  %v1303 = vmul.f32 %v1271, %v1295
  %v1304 = vmul.f32 %v1272, %v1296
  %v1305 = vld [vmem:[%s1 + $0x290] sm:$0xff]
  %v1306 = vld [vmem:[%s1 + $0x298] sm:$0xff]
  %v1308 = vsel %vm114, %v1305, 0
  %v1311 = vsel %vm114, %v1306, 0
  %1313 = vmatprep.subr.mxu0 0.0
  %1314 = vmatpush1.msra.mxu0 %v1297
  %1315 = vmatprep.subr.mxu0 0.0
  %1316 = vmatpush1.msra.mxu0 %v1298
  %1317 = vmatprep.subr.mxu0 0.0
  %1318 = vmatpush1.msra.mxu0 %v1299
  %1319 = vmatprep.subr.mxu0 0.0
  %1320 = vmatpush1.msra.mxu0 %v1300
  %1321 = vmatprep.subr.mxu0 0.0
  %1322 = vmatpush1.msra.mxu0 %v1301
  %1323 = vmatprep.subr.mxu0 0.0
  %1324 = vmatpush1.msra.mxu0 %v1302
  %1325 = vmatprep.subr.mxu0 0.0
  %1326 = vmatpush1.msra.mxu0 %v1303
  %1327 = vmatprep.subr.mxu0 0.0
  %1328 = vmatpush1.msra.mxu0 %v1304
  %1329 = vmatprep.subr.mxu0 0.0
  %1330 = vmatpush1.msra.mxu0 0.0
  %1331 = vmatprep.subr.mxu0 0.0
  %1332 = vmatpush1.msra.mxu0 0.0
  %1333 = vmatprep.subr.mxu0 0.0
  %1334 = vmatpush1.msra.mxu0 0.0
  %1335 = vmatprep.subr.mxu0 0.0
  %1336 = vmatpush1.msra.mxu0 0.0
  %1337 = vmatprep.subr.mxu0 0.0
  %1338 = vmatpush1.msra.mxu0 0.0
  %1339 = vmatprep.subr.mxu0 0.0
  %1340 = vmatpush1.msra.mxu0 0.0
  %1341 = vmatprep.subr.mxu0 0.0
  %1342 = vmatpush1.msra.mxu0 0.0
  %1343 = vmatprep.subr.mxu0 0.0
  %1344 = vmatpush1.msra.mxu0 0.0
  %1345 = vmatprep.subr.mxu0 0.0
  %1346 = vmatpush1.msra.mxu0 0.0
  %1347 = vmatprep.subr.mxu0 0.0
  %1348 = vmatpush1.msra.mxu0 0.0
  %1349 = vmatprep.subr.mxu0 0.0
  %1350 = vmatpush1.msra.mxu0 0.0
  %1351 = vmatprep.subr.mxu0 0.0
  %1352 = vmatpush1.msra.mxu0 0.0
  %1353 = vmatprep.subr.mxu0 0.0
  %1354 = vmatpush1.msra.mxu0 0.0
  %1355 = vmatprep.subr.mxu0 0.0
  %1356 = vmatpush1.msra.mxu0 0.0
  %1357 = vmatprep.subr.mxu0 0.0
  %1358 = vmatpush1.msra.mxu0 0.0
  %1359 = vmatprep.subr.mxu0 0.0
  %1360 = vmatpush1.msra.mxu0 0.0
  %1361 = vmatprep.subr.mxu0 0.0
  %1362 = vmatpush1.msra.mxu0 0.0
  %1363 = vmatprep.subr.mxu0 0.0
  %1364 = vmatpush1.msra.mxu0 0.0
  %1365 = vmatprep.subr.mxu0 0.0
  %1366 = vmatpush1.msra.mxu0 0.0
  %1367 = vmatprep.subr.mxu0 0.0
  %1368 = vmatpush1.msra.mxu0 0.0
  %1369 = vmatprep.subr.mxu0 0.0
  %1370 = vmatpush1.msra.mxu0 0.0
  %1371 = vmatprep.subr.mxu0 0.0
  %1372 = vmatpush1.msra.mxu0 0.0
  %1373 = vmatprep.subr.mxu0 0.0
  %1374 = vmatpush1.msra.mxu0 0.0
  %1375 = vmatprep.subr.mxu0 0.0
  %1376 = vmatpush1.msra.mxu0 0.0
  %1377 = vmatprep.mubr.f32.mxu0 0.0
  %1378 = vmatmul.mubr.f32.gmra.mrb[0].mxu0 %v1308
  %v1379 = vpop.f32.mrb[0].mxu0
  %v1380 = vadd.f32 0.0, %v1379
  %v1381 = vpop.f32.mrb[0].mxu0
  %1382 = vmatprep.mubr.f32.mxu0 0.0
  %1383 = vmatmul.mubr.f32.gmra.mrb[0].mxu0 %v1311
  %v1384 = vpop.f32.mrb[0].mxu0
  %v1385 = vadd.f32 0.0, %v1384
  %v1386 = vpop.f32.mrb[0].mxu0
  %1387 = vdwg.mxu0
  %v1388 = vadd.f32 %v938, %v1380
  %v1389 = vadd.f32 %v939, %v1385
  %v1390 = vld [vmem:[%s1 + $0x2a0] sm:$0xff]
  %v1391 = vld [vmem:[%s1 + $0x2a8] sm:$0xff]
  %v1392 = vadd.f32 %v1388, %v1390
  %v1393 = vadd.f32 %v1389, %v1391
  %v1395 = vsel %vm114, %v1392, 0
  %v1398 = vsel %vm114, %v1393, 0
  %1400 = vmatprep.subr.mxu0 0.0
  %1401 = vmatpush1.msra.mxu0 %v11
  %1402 = vmatprep.subr.mxu0 0.0
  %1403 = vmatpush1.msra.mxu0 %v12
  %1404 = vmatprep.subr.mxu0 0.0
  %1405 = vmatpush1.msra.mxu0 %v13
  %1406 = vmatprep.subr.mxu0 0.0
  %1407 = vmatpush1.msra.mxu0 %v14
  %1408 = vmatprep.subr.mxu0 0.0
  %1409 = vmatpush1.msra.mxu0 %v15
  %1410 = vmatprep.subr.mxu0 0.0
  %1411 = vmatpush1.msra.mxu0 %v16
  %1412 = vmatprep.subr.mxu0 0.0
  %1413 = vmatpush1.msra.mxu0 %v17
  %1414 = vmatprep.subr.mxu0 0.0
  %1415 = vmatpush1.msra.mxu0 %v18
  %1416 = vmatprep.subr.mxu0 0.0
  %1417 = vmatpush1.msra.mxu0 0.0
  %1418 = vmatprep.subr.mxu0 0.0
  %1419 = vmatpush1.msra.mxu0 0.0
  %1420 = vmatprep.subr.mxu0 0.0
  %1421 = vmatpush1.msra.mxu0 0.0
  %1422 = vmatprep.subr.mxu0 0.0
  %1423 = vmatpush1.msra.mxu0 0.0
  %1424 = vmatprep.subr.mxu0 0.0
  %1425 = vmatpush1.msra.mxu0 0.0
  %1426 = vmatprep.subr.mxu0 0.0
  %1427 = vmatpush1.msra.mxu0 0.0
  %1428 = vmatprep.subr.mxu0 0.0
  %1429 = vmatpush1.msra.mxu0 0.0
  %1430 = vmatprep.subr.mxu0 0.0
  %1431 = vmatpush1.msra.mxu0 0.0
  %1432 = vmatprep.subr.mxu0 0.0
  %1433 = vmatpush1.msra.mxu0 0.0
  %1434 = vmatprep.subr.mxu0 0.0
  %1435 = vmatpush1.msra.mxu0 0.0
  %1436 = vmatprep.subr.mxu0 0.0
  %1437 = vmatpush1.msra.mxu0 0.0
  %1438 = vmatprep.subr.mxu0 0.0
  %1439 = vmatpush1.msra.mxu0 0.0
  %1440 = vmatprep.subr.mxu0 0.0
  %1441 = vmatpush1.msra.mxu0 0.0
  %1442 = vmatprep.subr.mxu0 0.0
  %1443 = vmatpush1.msra.mxu0 0.0
  %1444 = vmatprep.subr.mxu0 0.0
  %1445 = vmatpush1.msra.mxu0 0.0
  %1446 = vmatprep.subr.mxu0 0.0
  %1447 = vmatpush1.msra.mxu0 0.0
  %1448 = vmatprep.subr.mxu0 0.0
  %1449 = vmatpush1.msra.mxu0 0.0
  %1450 = vmatprep.subr.mxu0 0.0
  %1451 = vmatpush1.msra.mxu0 0.0
  %1452 = vmatprep.subr.mxu0 0.0
  %1453 = vmatpush1.msra.mxu0 0.0
  %1454 = vmatprep.subr.mxu0 0.0
  %1455 = vmatpush1.msra.mxu0 0.0
  %1456 = vmatprep.subr.mxu0 0.0
  %1457 = vmatpush1.msra.mxu0 0.0
  %1458 = vmatprep.subr.mxu0 0.0
  %1459 = vmatpush1.msra.mxu0 0.0
  %1460 = vmatprep.subr.mxu0 0.0
  %1461 = vmatpush1.msra.mxu0 0.0
  %1462 = vmatprep.subr.mxu0 0.0
  %1463 = vmatpush1.msra.mxu0 0.0
  %1464 = vmatprep.mubr.f32.mxu0 0.0
  %1465 = vmatmul.mubr.f32.gmra.mrb[0].mxu0 %v1395
  %v1466 = vpop.f32.mrb[0].mxu0
  %v1467 = vadd.f32 0.0, %v1466
  %v1468 = vpop.f32.mrb[0].mxu0
  %1469 = vmatprep.mubr.f32.mxu0 0.0
  %1470 = vmatmul.mubr.f32.gmra.mrb[0].mxu0 %v1398
  %v1471 = vpop.f32.mrb[0].mxu0
  %v1472 = vadd.f32 0.0, %v1471
  %v1473 = vpop.f32.mrb[0].mxu0
  %1474 = vdwg.mxu0
  %v1475 = vmul.f32 %v1392, %v1392
  %v1476 = vmul.f32 %v1393, %v1393
  %v1478 = vsel %vm114, %v1475, 0
  %v1481 = vsel %vm114, %v1476, 0
  %1483 = vmatprep.subr.mxu0 0.0
  %1484 = vmatpush1.msra.mxu0 %v11
  %1485 = vmatprep.subr.mxu0 0.0
  %1486 = vmatpush1.msra.mxu0 %v12
  %1487 = vmatprep.subr.mxu0 0.0
  %1488 = vmatpush1.msra.mxu0 %v13
  %1489 = vmatprep.subr.mxu0 0.0
  %1490 = vmatpush1.msra.mxu0 %v14
  %1491 = vmatprep.subr.mxu0 0.0
  %1492 = vmatpush1.msra.mxu0 %v15
  %1493 = vmatprep.subr.mxu0 0.0
  %1494 = vmatpush1.msra.mxu0 %v16
  %1495 = vmatprep.subr.mxu0 0.0
  %1496 = vmatpush1.msra.mxu0 %v17
  %1497 = vmatprep.subr.mxu0 0.0
  %1498 = vmatpush1.msra.mxu0 %v18
  %1499 = vmatprep.subr.mxu0 0.0
  %1500 = vmatpush1.msra.mxu0 0.0
  %1501 = vmatprep.subr.mxu0 0.0
  %1502 = vmatpush1.msra.mxu0 0.0
  %1503 = vmatprep.subr.mxu0 0.0
  %1504 = vmatpush1.msra.mxu0 0.0
  %1505 = vmatprep.subr.mxu0 0.0
  %1506 = vmatpush1.msra.mxu0 0.0
  %1507 = vmatprep.subr.mxu0 0.0
  %1508 = vmatpush1.msra.mxu0 0.0
  %1509 = vmatprep.subr.mxu0 0.0
  %1510 = vmatpush1.msra.mxu0 0.0
  %1511 = vmatprep.subr.mxu0 0.0
  %1512 = vmatpush1.msra.mxu0 0.0
  %1513 = vmatprep.subr.mxu0 0.0
  %1514 = vmatpush1.msra.mxu0 0.0
  %1515 = vmatprep.subr.mxu0 0.0
  %1516 = vmatpush1.msra.mxu0 0.0
  %1517 = vmatprep.subr.mxu0 0.0
  %1518 = vmatpush1.msra.mxu0 0.0
  %1519 = vmatprep.subr.mxu0 0.0
  %1520 = vmatpush1.msra.mxu0 0.0
  %1521 = vmatprep.subr.mxu0 0.0
  %1522 = vmatpush1.msra.mxu0 0.0
  %1523 = vmatprep.subr.mxu0 0.0
  %1524 = vmatpush1.msra.mxu0 0.0
  %1525 = vmatprep.subr.mxu0 0.0
  %1526 = vmatpush1.msra.mxu0 0.0
  %1527 = vmatprep.subr.mxu0 0.0
  %1528 = vmatpush1.msra.mxu0 0.0
  %1529 = vmatprep.subr.mxu0 0.0
  %1530 = vmatpush1.msra.mxu0 0.0
  %1531 = vmatprep.subr.mxu0 0.0
  %1532 = vmatpush1.msra.mxu0 0.0
  %1533 = vmatprep.subr.mxu0 0.0
  %1534 = vmatpush1.msra.mxu0 0.0
  %1535 = vmatprep.subr.mxu0 0.0
  %1536 = vmatpush1.msra.mxu0 0.0
  %1537 = vmatprep.subr.mxu0 0.0
  %1538 = vmatpush1.msra.mxu0 0.0
  %1539 = vmatprep.subr.mxu0 0.0
  %1540 = vmatpush1.msra.mxu0 0.0
  %1541 = vmatprep.subr.mxu0 0.0
  %1542 = vmatpush1.msra.mxu0 0.0
  %1543 = vmatprep.subr.mxu0 0.0
  %1544 = vmatpush1.msra.mxu0 0.0
  %1545 = vmatprep.subr.mxu0 0.0
  %1546 = vmatpush1.msra.mxu0 0.0
  %1547 = vmatprep.mubr.f32.mxu0 0.0
  %1548 = vmatmul.mubr.f32.gmra.mrb[0].mxu0 %v1478
  %v1549 = vpop.f32.mrb[0].mxu0
  %v1550 = vadd.f32 0.0, %v1549
  %v1551 = vpop.f32.mrb[0].mxu0
  %1552 = vmatprep.mubr.f32.mxu0 0.0
  %1553 = vmatmul.mubr.f32.gmra.mrb[0].mxu0 %v1481
  %v1554 = vpop.f32.mrb[0].mxu0
  %v1555 = vadd.f32 0.0, %v1554
  %v1556 = vpop.f32.mrb[0].mxu0
  %1557 = vdwg.mxu0
  %v1558 = vsub.f32 %v1392, %v1467
  %v1559 = vsub.f32 %v1393, %v1472
  %v1560 = vmul.f32 %v1467, %v1467
  %v1561 = vmul.f32 %v1472, %v1472
  %v1562 = vsub.f32 %v1550, %v1560
  %v1563 = vsub.f32 %v1555, %v1561
  %v1564 = vadd.f32 %v1562, 1e-05
  %v1565 = vadd.f32 %v1563, 1e-05
  %v1566 = vrsqrt.pop %v1564
  %v1567 = vrsqrt.pop %v1565
  %v1568 = vmul.f32 %v1558, %v1566
  %v1569 = vmul.f32 %v1559, %v1567
  %v1570 = vld [vmem:[%s1 + $0x2b0] sm:$0xff]
  %v1571 = vld [vmem:[%s1 + $0x2b8] sm:$0xff]
  %v1572 = vld [vmem:[%s1 + $0x2c0] sm:$0xff]
  %v1573 = vld [vmem:[%s1 + $0x2c8] sm:$0xff]
  %v1574 = vld [vmem:[%s1 + $0x2d0] sm:$0xff]
  %v1575 = vld [vmem:[%s1 + $0x2d8] sm:$0xff]
  %v1576 = vld [vmem:[%s1 + $0x2e0] sm:$0xff]
  %v1577 = vld [vmem:[%s1 + $0x2e8] sm:$0xff]
  %v1578 = vld [vmem:[%s1 + $0x2f0] sm:$0xff]
  %v1579 = vld [vmem:[%s1 + $0x2f8] sm:$0xff]
  %v1581 = vsel %vm114, %v1568, 0
  %v1584 = vsel %vm114, %v1569, 0
  %1586 = vmatprep.subr.mxu0 0.0
  %1587 = vmatpush1.msra.mxu0 %v1570
  %1588 = vmatprep.subr.mxu0 0.0
  %1589 = vmatpush1.msra.mxu0 %v1571
  %1590 = vmatprep.subr.mxu0 0.0
  %1591 = vmatpush1.msra.mxu0 %v1572
  %1592 = vmatprep.subr.mxu0 0.0
  %1593 = vmatpush1.msra.mxu0 %v1573
  %1594 = vmatprep.subr.mxu0 0.0
  %1595 = vmatpush1.msra.mxu0 %v1574
  %1596 = vmatprep.subr.mxu0 0.0
  %1597 = vmatpush1.msra.mxu0 %v1575
  %1598 = vmatprep.subr.mxu0 0.0
  %1599 = vmatpush1.msra.mxu0 %v1576
  %1600 = vmatprep.subr.mxu0 0.0
  %1601 = vmatpush1.msra.mxu0 %v1577
  %1602 = vmatprep.subr.mxu0 0.0
  %1603 = vmatpush1.msra.mxu0 0.0
  %1604 = vmatprep.subr.mxu0 0.0
  %1605 = vmatpush1.msra.mxu0 0.0
  %1606 = vmatprep.subr.mxu0 0.0
  %1607 = vmatpush1.msra.mxu0 0.0
  %1608 = vmatprep.subr.mxu0 0.0
  %1609 = vmatpush1.msra.mxu0 0.0
  %1610 = vmatprep.subr.mxu0 0.0
  %1611 = vmatpush1.msra.mxu0 0.0
  %1612 = vmatprep.subr.mxu0 0.0
  %1613 = vmatpush1.msra.mxu0 0.0
  %1614 = vmatprep.subr.mxu0 0.0
  %1615 = vmatpush1.msra.mxu0 0.0
  %1616 = vmatprep.subr.mxu0 0.0
  %1617 = vmatpush1.msra.mxu0 0.0
  %1618 = vmatprep.subr.mxu0 0.0
  %1619 = vmatpush1.msra.mxu0 0.0
  %1620 = vmatprep.subr.mxu0 0.0
  %1621 = vmatpush1.msra.mxu0 0.0
  %1622 = vmatprep.subr.mxu0 0.0
  %1623 = vmatpush1.msra.mxu0 0.0
  %1624 = vmatprep.subr.mxu0 0.0
  %1625 = vmatpush1.msra.mxu0 0.0
  %1626 = vmatprep.subr.mxu0 0.0
  %1627 = vmatpush1.msra.mxu0 0.0
  %1628 = vmatprep.subr.mxu0 0.0
  %1629 = vmatpush1.msra.mxu0 0.0
  %1630 = vmatprep.subr.mxu0 0.0
  %1631 = vmatpush1.msra.mxu0 0.0
  %1632 = vmatprep.subr.mxu0 0.0
  %1633 = vmatpush1.msra.mxu0 0.0
  %1634 = vmatprep.subr.mxu0 0.0
  %1635 = vmatpush1.msra.mxu0 0.0
  %1636 = vmatprep.subr.mxu0 0.0
  %1637 = vmatpush1.msra.mxu0 0.0
  %1638 = vmatprep.subr.mxu0 0.0
  %1639 = vmatpush1.msra.mxu0 0.0
  %1640 = vmatprep.subr.mxu0 0.0
  %1641 = vmatpush1.msra.mxu0 0.0
  %1642 = vmatprep.subr.mxu0 0.0
  %1643 = vmatpush1.msra.mxu0 0.0
  %1644 = vmatprep.subr.mxu0 0.0
  %1645 = vmatpush1.msra.mxu0 0.0
  %1646 = vmatprep.subr.mxu0 0.0
  %1647 = vmatpush1.msra.mxu0 0.0
  %1648 = vmatprep.subr.mxu0 0.0
  %1649 = vmatpush1.msra.mxu0 0.0
  %1650 = vmatprep.mubr.f32.mxu0 0.0
  %1651 = vmatmul.mubr.f32.gmra.mrb[0].mxu0 %v1581
  %v1652 = vpop.f32.mrb[0].mxu0
  %v1653 = vadd.f32 %v1578, %v1652
  %v1654 = vpop.f32.mrb[0].mxu0
  %1655 = vmatprep.mubr.f32.mxu0 0.0
  %1656 = vmatmul.mubr.f32.gmra.mrb[0].mxu0 %v1584
  %v1657 = vpop.f32.mrb[0].mxu0
  %v1658 = vadd.f32 %v1579, %v1657
  %v1659 = vpop.f32.mrb[0].mxu0
  %1660 = vdwg.mxu0
  %v1661 = vmul.f32 %v1653, 0.5
  %v1662 = vmul.f32 %v1658, 0.5
  %v1663 = vmul.f32 %v1653, %v449
  %v1664 = vmul.f32 %v1658, %v449
  %v1665 = verf.f32.pop %v1663
  %v1666 = verf.f32.pop %v1664
  %v1667 = vadd.f32 %v1665, 1.0
  %v1668 = vadd.f32 %v1666, 1.0
  %v1669 = vmul.f32 %v1661, %v1667
  %v1670 = vmul.f32 %v1662, %v1668
  %v1671 = vld [vmem:[%s1 + $0x300] sm:$0xff]
  %v1672 = vld [vmem:[%s1 + $0x308] sm:$0xff]
  %v1673 = vld [vmem:[%s1 + $0x310] sm:$0xff]
  %v1674 = vld [vmem:[%s1 + $0x318] sm:$0xff]
  %v1676 = vsel %vm852, %v1669, 0
  %v1679 = vsel %vm852, %v1670, 0
  %1681 = vmatprep.subr.mxu0 0.0
  %1682 = vmatpush1.msra.mxu0 %v1671
  %1683 = vmatprep.subr.mxu0 0.0
  %1684 = vmatpush1.msra.mxu0 %v1672
  %1685 = vmatprep.subr.mxu0 0.0
  %1686 = vmatpush1.msra.mxu0 %v1673
  %1687 = vmatprep.subr.mxu0 0.0
  %1688 = vmatpush1.msra.mxu0 %v1674
  %1689 = vmatprep.subr.mxu0 0.0
  %1690 = vmatpush1.msra.mxu0 0.0
  %1691 = vmatprep.subr.mxu0 0.0
  %1692 = vmatpush1.msra.mxu0 0.0
  %1693 = vmatprep.subr.mxu0 0.0
  %1694 = vmatpush1.msra.mxu0 0.0
  %1695 = vmatprep.subr.mxu0 0.0
  %1696 = vmatpush1.msra.mxu0 0.0
  %1697 = vmatprep.subr.mxu0 0.0
  %1698 = vmatpush1.msra.mxu0 0.0
  %1699 = vmatprep.subr.mxu0 0.0
  %1700 = vmatpush1.msra.mxu0 0.0
  %1701 = vmatprep.subr.mxu0 0.0
  %1702 = vmatpush1.msra.mxu0 0.0
  %1703 = vmatprep.subr.mxu0 0.0
  %1704 = vmatpush1.msra.mxu0 0.0
  %1705 = vmatprep.subr.mxu0 0.0
  %1706 = vmatpush1.msra.mxu0 0.0
  %1707 = vmatprep.subr.mxu0 0.0
  %1708 = vmatpush1.msra.mxu0 0.0
  %1709 = vmatprep.subr.mxu0 0.0
  %1710 = vmatpush1.msra.mxu0 0.0
  %1711 = vmatprep.subr.mxu0 0.0
  %1712 = vmatpush1.msra.mxu0 0.0
  %1713 = vmatprep.subr.mxu0 0.0
  %1714 = vmatpush1.msra.mxu0 0.0
  %1715 = vmatprep.subr.mxu0 0.0
  %1716 = vmatpush1.msra.mxu0 0.0
  %1717 = vmatprep.subr.mxu0 0.0
  %1718 = vmatpush1.msra.mxu0 0.0
  %1719 = vmatprep.subr.mxu0 0.0
  %1720 = vmatpush1.msra.mxu0 0.0
  %1721 = vmatprep.subr.mxu0 0.0
  %1722 = vmatpush1.msra.mxu0 0.0
  %1723 = vmatprep.subr.mxu0 0.0
  %1724 = vmatpush1.msra.mxu0 0.0
  %1725 = vmatprep.subr.mxu0 0.0
  %1726 = vmatpush1.msra.mxu0 0.0
  %1727 = vmatprep.subr.mxu0 0.0
  %1728 = vmatpush1.msra.mxu0 0.0
  %1729 = vmatprep.subr.mxu0 0.0
  %1730 = vmatpush1.msra.mxu0 0.0
  %1731 = vmatprep.subr.mxu0 0.0
  %1732 = vmatpush1.msra.mxu0 0.0
  %1733 = vmatprep.subr.mxu0 0.0
  %1734 = vmatpush1.msra.mxu0 0.0
  %1735 = vmatprep.subr.mxu0 0.0
  %1736 = vmatpush1.msra.mxu0 0.0
  %1737 = vmatprep.subr.mxu0 0.0
  %1738 = vmatpush1.msra.mxu0 0.0
  %1739 = vmatprep.subr.mxu0 0.0
  %1740 = vmatpush1.msra.mxu0 0.0
  %1741 = vmatprep.subr.mxu0 0.0
  %1742 = vmatpush1.msra.mxu0 0.0
  %1743 = vmatprep.subr.mxu0 0.0
  %1744 = vmatpush1.msra.mxu0 0.0
  %1745 = vmatprep.mubr.f32.mxu0 0.0
  %1746 = vmatmul.mubr.f32.gmra.mrb[0].mxu0 %v1676
  %v1747 = vpop.f32.mrb[0].mxu0
  %v1748 = vadd.f32 0.0, %v1747
  %v1749 = vpop.f32.mrb[0].mxu0
  %1750 = vmatprep.mubr.f32.mxu0 0.0
  %1751 = vmatmul.mubr.f32.gmra.mrb[0].mxu0 %v1679
  %v1752 = vpop.f32.mrb[0].mxu0
  %v1753 = vadd.f32 0.0, %v1752
  %v1754 = vpop.f32.mrb[0].mxu0
  %1755 = vdwg.mxu0
  %v1756 = vadd.f32 %v1392, %v1748
  %v1757 = vadd.f32 %v1393, %v1753
  %v1758 = vld [vmem:[%s1 + $0x320] sm:$0xff]
  %v1759 = vld [vmem:[%s1 + $0x328] sm:$0xff]
  %v1760 = vadd.f32 %v1756, %v1758
  %v1761 = vadd.f32 %v1757, %v1759
  %v1763 = vsel %vm114, %v1760, 0
  %v1766 = vsel %vm114, %v1761, 0
  %1768 = vmatprep.subr.mxu0 0.0
  %1769 = vmatpush1.msra.mxu0 %v11
  %1770 = vmatprep.subr.mxu0 0.0
  %1771 = vmatpush1.msra.mxu0 %v12
  %1772 = vmatprep.subr.mxu0 0.0
  %1773 = vmatpush1.msra.mxu0 %v13
  %1774 = vmatprep.subr.mxu0 0.0
  %1775 = vmatpush1.msra.mxu0 %v14
  %1776 = vmatprep.subr.mxu0 0.0
  %1777 = vmatpush1.msra.mxu0 %v15
  %1778 = vmatprep.subr.mxu0 0.0
  %1779 = vmatpush1.msra.mxu0 %v16
  %1780 = vmatprep.subr.mxu0 0.0
  %1781 = vmatpush1.msra.mxu0 %v17
  %1782 = vmatprep.subr.mxu0 0.0
  %1783 = vmatpush1.msra.mxu0 %v18
  %1784 = vmatprep.subr.mxu0 0.0
  %1785 = vmatpush1.msra.mxu0 0.0
  %1786 = vmatprep.subr.mxu0 0.0
  %1787 = vmatpush1.msra.mxu0 0.0
  %1788 = vmatprep.subr.mxu0 0.0
  %1789 = vmatpush1.msra.mxu0 0.0
  %1790 = vmatprep.subr.mxu0 0.0
  %1791 = vmatpush1.msra.mxu0 0.0
  %1792 = vmatprep.subr.mxu0 0.0
  %1793 = vmatpush1.msra.mxu0 0.0
  %1794 = vmatprep.subr.mxu0 0.0
  %1795 = vmatpush1.msra.mxu0 0.0
  %1796 = vmatprep.subr.mxu0 0.0
  %1797 = vmatpush1.msra.mxu0 0.0
  %1798 = vmatprep.subr.mxu0 0.0
  %1799 = vmatpush1.msra.mxu0 0.0
  %1800 = vmatprep.subr.mxu0 0.0
  %1801 = vmatpush1.msra.mxu0 0.0
  %1802 = vmatprep.subr.mxu0 0.0
  %1803 = vmatpush1.msra.mxu0 0.0
  %1804 = vmatprep.subr.mxu0 0.0
  %1805 = vmatpush1.msra.mxu0 0.0
  %1806 = vmatprep.subr.mxu0 0.0
  %1807 = vmatpush1.msra.mxu0 0.0
  %1808 = vmatprep.subr.mxu0 0.0
  %1809 = vmatpush1.msra.mxu0 0.0
  %1810 = vmatprep.subr.mxu0 0.0
  %1811 = vmatpush1.msra.mxu0 0.0
  %1812 = vmatprep.subr.mxu0 0.0
  %1813 = vmatpush1.msra.mxu0 0.0
  %1814 = vmatprep.subr.mxu0 0.0
  %1815 = vmatpush1.msra.mxu0 0.0
  %1816 = vmatprep.subr.mxu0 0.0
  %1817 = vmatpush1.msra.mxu0 0.0
  %1818 = vmatprep.subr.mxu0 0.0
  %1819 = vmatpush1.msra.mxu0 0.0
  %1820 = vmatprep.subr.mxu0 0.0
  %1821 = vmatpush1.msra.mxu0 0.0
  %1822 = vmatprep.subr.mxu0 0.0
  %1823 = vmatpush1.msra.mxu0 0.0
  %1824 = vmatprep.subr.mxu0 0.0
  %1825 = vmatpush1.msra.mxu0 0.0
  %1826 = vmatprep.subr.mxu0 0.0
  %1827 = vmatpush1.msra.mxu0 0.0
  %1828 = vmatprep.subr.mxu0 0.0
  %1829 = vmatpush1.msra.mxu0 0.0
  %1830 = vmatprep.subr.mxu0 0.0
  %1831 = vmatpush1.msra.mxu0 0.0
  %1832 = vmatprep.mubr.f32.mxu0 0.0
  %1833 = vmatmul.mubr.f32.gmra.mrb[0].mxu0 %v1763
  %v1834 = vpop.f32.mrb[0].mxu0
  %v1835 = vadd.f32 0.0, %v1834
  %v1836 = vpop.f32.mrb[0].mxu0
  %1837 = vmatprep.mubr.f32.mxu0 0.0
  %1838 = vmatmul.mubr.f32.gmra.mrb[0].mxu0 %v1766
  %v1839 = vpop.f32.mrb[0].mxu0
  %v1840 = vadd.f32 0.0, %v1839
  %v1841 = vpop.f32.mrb[0].mxu0
  %1842 = vdwg.mxu0
  %v1843 = vmul.f32 %v1760, %v1760
  %v1844 = vmul.f32 %v1761, %v1761
  %v1846 = vsel %vm114, %v1843, 0
  %v1849 = vsel %vm114, %v1844, 0
  %1851 = vmatprep.subr.mxu0 0.0
  %1852 = vmatpush1.msra.mxu0 %v11
  %1853 = vmatprep.subr.mxu0 0.0
  %1854 = vmatpush1.msra.mxu0 %v12
  %1855 = vmatprep.subr.mxu0 0.0
  %1856 = vmatpush1.msra.mxu0 %v13
  %1857 = vmatprep.subr.mxu0 0.0
  %1858 = vmatpush1.msra.mxu0 %v14
  %1859 = vmatprep.subr.mxu0 0.0
  %1860 = vmatpush1.msra.mxu0 %v15
  %1861 = vmatprep.subr.mxu0 0.0
  %1862 = vmatpush1.msra.mxu0 %v16
  %1863 = vmatprep.subr.mxu0 0.0
  %1864 = vmatpush1.msra.mxu0 %v17
  %1865 = vmatprep.subr.mxu0 0.0
  %1866 = vmatpush1.msra.mxu0 %v18
  %1867 = vmatprep.subr.mxu0 0.0
  %1868 = vmatpush1.msra.mxu0 0.0
  %1869 = vmatprep.subr.mxu0 0.0
  %1870 = vmatpush1.msra.mxu0 0.0
  %1871 = vmatprep.subr.mxu0 0.0
  %1872 = vmatpush1.msra.mxu0 0.0
  %1873 = vmatprep.subr.mxu0 0.0
  %1874 = vmatpush1.msra.mxu0 0.0
  %1875 = vmatprep.subr.mxu0 0.0
  %1876 = vmatpush1.msra.mxu0 0.0
  %1877 = vmatprep.subr.mxu0 0.0
  %1878 = vmatpush1.msra.mxu0 0.0
  %1879 = vmatprep.subr.mxu0 0.0
  %1880 = vmatpush1.msra.mxu0 0.0
  %1881 = vmatprep.subr.mxu0 0.0
  %1882 = vmatpush1.msra.mxu0 0.0
  %1883 = vmatprep.subr.mxu0 0.0
  %1884 = vmatpush1.msra.mxu0 0.0
  %1885 = vmatprep.subr.mxu0 0.0
  %1886 = vmatpush1.msra.mxu0 0.0
  %1887 = vmatprep.subr.mxu0 0.0
  %1888 = vmatpush1.msra.mxu0 0.0
  %1889 = vmatprep.subr.mxu0 0.0
  %1890 = vmatpush1.msra.mxu0 0.0
  %1891 = vmatprep.subr.mxu0 0.0
  %1892 = vmatpush1.msra.mxu0 0.0
  %1893 = vmatprep.subr.mxu0 0.0
  %1894 = vmatpush1.msra.mxu0 0.0
  %1895 = vmatprep.subr.mxu0 0.0
  %1896 = vmatpush1.msra.mxu0 0.0
  %1897 = vmatprep.subr.mxu0 0.0
  %1898 = vmatpush1.msra.mxu0 0.0
  %1899 = vmatprep.subr.mxu0 0.0
  %1900 = vmatpush1.msra.mxu0 0.0
  %1901 = vmatprep.subr.mxu0 0.0
  %1902 = vmatpush1.msra.mxu0 0.0
  %1903 = vmatprep.subr.mxu0 0.0
  %1904 = vmatpush1.msra.mxu0 0.0
  %1905 = vmatprep.subr.mxu0 0.0
  %1906 = vmatpush1.msra.mxu0 0.0
  %1907 = vmatprep.subr.mxu0 0.0
  %1908 = vmatpush1.msra.mxu0 0.0
  %1909 = vmatprep.subr.mxu0 0.0
  %1910 = vmatpush1.msra.mxu0 0.0
  %1911 = vmatprep.subr.mxu0 0.0
  %1912 = vmatpush1.msra.mxu0 0.0
  %1913 = vmatprep.subr.mxu0 0.0
  %1914 = vmatpush1.msra.mxu0 0.0
  %1915 = vmatprep.mubr.f32.mxu0 0.0
  %1916 = vmatmul.mubr.f32.gmra.mrb[0].mxu0 %v1846
  %v1917 = vpop.f32.mrb[0].mxu0
  %v1918 = vadd.f32 0.0, %v1917
  %v1919 = vpop.f32.mrb[0].mxu0
  %1920 = vmatprep.mubr.f32.mxu0 0.0
  %1921 = vmatmul.mubr.f32.gmra.mrb[0].mxu0 %v1849
  %v1922 = vpop.f32.mrb[0].mxu0
  %v1923 = vadd.f32 0.0, %v1922
  %v1924 = vpop.f32.mrb[0].mxu0
  %1925 = vdwg.mxu0
  %v1926 = vsub.f32 %v1760, %v1835
  %v1927 = vsub.f32 %v1761, %v1840
  %v1928 = vmul.f32 %v1835, %v1835
  %v1929 = vmul.f32 %v1840, %v1840
  %v1930 = vsub.f32 %v1918, %v1928
  %v1931 = vsub.f32 %v1923, %v1929
  %v1932 = vadd.f32 %v1930, 1e-05
  %v1933 = vadd.f32 %v1931, 1e-05
  %v1934 = vrsqrt.pop %v1932
  %v1935 = vrsqrt.pop %v1933
  %v1936 = vmul.f32 %v1926, %v1934
  %v1937 = vmul.f32 %v1927, %v1935
  %v1938 = vld [vmem:[%s1 + $0x330] sm:$0xff]
  %v1940 = vsel %vm311, %v1938, 0
  %1942 = vmatprep.subr.mxu0 0.0
  %1943 = vmatpush1.msra.mxu0 %v1936
  %1944 = vmatprep.subr.mxu0 0.0
  %1945 = vmatpush1.msra.mxu0 %v1937
  %1946 = vmatprep.subr.mxu0 0.0
  %1947 = vmatpush1.msra.mxu0 0.0
  %1948 = vmatprep.subr.mxu0 0.0
  %1949 = vmatpush1.msra.mxu0 0.0
  %1950 = vmatprep.subr.mxu0 0.0
  %1951 = vmatpush1.msra.mxu0 0.0
  %1952 = vmatprep.subr.mxu0 0.0
  %1953 = vmatpush1.msra.mxu0 0.0
  %1954 = vmatprep.subr.mxu0 0.0
  %1955 = vmatpush1.msra.mxu0 0.0
  %1956 = vmatprep.subr.mxu0 0.0
  %1957 = vmatpush1.msra.mxu0 0.0
  %1958 = vmatprep.subr.mxu0 0.0
  %1959 = vmatpush1.msra.mxu0 0.0
  %1960 = vmatprep.subr.mxu0 0.0
  %1961 = vmatpush1.msra.mxu0 0.0
  %1962 = vmatprep.subr.mxu0 0.0
  %1963 = vmatpush1.msra.mxu0 0.0
  %1964 = vmatprep.subr.mxu0 0.0
  %1965 = vmatpush1.msra.mxu0 0.0
  %1966 = vmatprep.subr.mxu0 0.0
  %1967 = vmatpush1.msra.mxu0 0.0
  %1968 = vmatprep.subr.mxu0 0.0
  %1969 = vmatpush1.msra.mxu0 0.0
  %1970 = vmatprep.subr.mxu0 0.0
  %1971 = vmatpush1.msra.mxu0 0.0
  %1972 = vmatprep.subr.mxu0 0.0
  %1973 = vmatpush1.msra.mxu0 0.0
  %1974 = vmatprep.subr.mxu0 0.0
  %1975 = vmatpush1.msra.mxu0 0.0
  %1976 = vmatprep.subr.mxu0 0.0
  %1977 = vmatpush1.msra.mxu0 0.0
  %1978 = vmatprep.subr.mxu0 0.0
  %1979 = vmatpush1.msra.mxu0 0.0
  %1980 = vmatprep.subr.mxu0 0.0
  %1981 = vmatpush1.msra.mxu0 0.0
  %1982 = vmatprep.subr.mxu0 0.0
  %1983 = vmatpush1.msra.mxu0 0.0
  %1984 = vmatprep.subr.mxu0 0.0
  %1985 = vmatpush1.msra.mxu0 0.0
  %1986 = vmatprep.subr.mxu0 0.0
  %1987 = vmatpush1.msra.mxu0 0.0
  %1988 = vmatprep.subr.mxu0 0.0
  %1989 = vmatpush1.msra.mxu0 0.0
  %1990 = vmatprep.subr.mxu0 0.0
  %1991 = vmatpush1.msra.mxu0 0.0
  %1992 = vmatprep.subr.mxu0 0.0
  %1993 = vmatpush1.msra.mxu0 0.0
  %1994 = vmatprep.subr.mxu0 0.0
  %1995 = vmatpush1.msra.mxu0 0.0
  %1996 = vmatprep.subr.mxu0 0.0
  %1997 = vmatpush1.msra.mxu0 0.0
  %1998 = vmatprep.subr.mxu0 0.0
  %1999 = vmatpush1.msra.mxu0 0.0
  %2000 = vmatprep.subr.mxu0 0.0
  %2001 = vmatpush1.msra.mxu0 0.0
  %2002 = vmatprep.subr.mxu0 0.0
  %2003 = vmatpush1.msra.mxu0 0.0
  %2004 = vmatprep.subr.mxu0 0.0
  %2005 = vmatpush1.msra.mxu0 0.0
  %2006 = vmatprep.mubr.f32.mxu0 0.0
  %2007 = vmatmul.mubr.f32.gmra.mrb[0].mxu0 %v1940
  %v2008 = vpop.f32.mrb[0].mxu0
  %v2009 = vadd.f32 0.0, %v2008
  %v2010 = vpop.f32.mrb[0].mxu0
  %2011 = vdwg.mxu0
  %v2012 = vld [vmem:[%s1 + $0x338] sm:$0xff]
  %v2013 = vld [vmem:[%s1 + $0x340] sm:$0xff]
  %v2014 = vld [vmem:[%s1 + $0x348] sm:$0xff]
  %v2015 = vld [vmem:[%s1 + $0x350] sm:$0xff]
  %v2016 = vld [vmem:[%s1 + $0x358] sm:$0xff]
  %v2017 = vld [vmem:[%s1 + $0x360] sm:$0xff]
  %v2018 = vld [vmem:[%s1 + $0x368] sm:$0xff]
  %v2019 = vld [vmem:[%s1 + $0x370] sm:$0xff]
  %v2020 = vld [vmem:[%s1 + $0x378] sm:$0xff]
  %v2022 = vsel %vm114, %v2009, 0
  %2024 = vmatprep.subr.mxu0 0.0
  %2025 = vmatpush1.msra.mxu0 %v2012
  %2026 = vmatprep.subr.mxu0 0.0
  %2027 = vmatpush1.msra.mxu0 %v2013
  %2028 = vmatprep.subr.mxu0 0.0
  %2029 = vmatpush1.msra.mxu0 %v2014
  %2030 = vmatprep.subr.mxu0 0.0
  %2031 = vmatpush1.msra.mxu0 %v2015
  %2032 = vmatprep.subr.mxu0 0.0
  %2033 = vmatpush1.msra.mxu0 %v2016
  %2034 = vmatprep.subr.mxu0 0.0
  %2035 = vmatpush1.msra.mxu0 %v2017
  %2036 = vmatprep.subr.mxu0 0.0
  %2037 = vmatpush1.msra.mxu0 %v2018
  %2038 = vmatprep.subr.mxu0 0.0
  %2039 = vmatpush1.msra.mxu0 %v2019
  %2040 = vmatprep.subr.mxu0 0.0
  %2041 = vmatpush1.msra.mxu0 0.0
  %2042 = vmatprep.subr.mxu0 0.0
  %2043 = vmatpush1.msra.mxu0 0.0
  %2044 = vmatprep.subr.mxu0 0.0
  %2045 = vmatpush1.msra.mxu0 0.0
  %2046 = vmatprep.subr.mxu0 0.0
  %2047 = vmatpush1.msra.mxu0 0.0
  %2048 = vmatprep.subr.mxu0 0.0
  %2049 = vmatpush1.msra.mxu0 0.0
  %2050 = vmatprep.subr.mxu0 0.0
  %2051 = vmatpush1.msra.mxu0 0.0
  %2052 = vmatprep.subr.mxu0 0.0
  %2053 = vmatpush1.msra.mxu0 0.0
  %2054 = vmatprep.subr.mxu0 0.0
  %2055 = vmatpush1.msra.mxu0 0.0
  %2056 = vmatprep.subr.mxu0 0.0
  %2057 = vmatpush1.msra.mxu0 0.0
  %2058 = vmatprep.subr.mxu0 0.0
  %2059 = vmatpush1.msra.mxu0 0.0
  %2060 = vmatprep.subr.mxu0 0.0
  %2061 = vmatpush1.msra.mxu0 0.0
  %2062 = vmatprep.subr.mxu0 0.0
  %2063 = vmatpush1.msra.mxu0 0.0
  %2064 = vmatprep.subr.mxu0 0.0
  %2065 = vmatpush1.msra.mxu0 0.0
  %2066 = vmatprep.subr.mxu0 0.0
  %2067 = vmatpush1.msra.mxu0 0.0
  %2068 = vmatprep.subr.mxu0 0.0
  %2069 = vmatpush1.msra.mxu0 0.0
  %2070 = vmatprep.subr.mxu0 0.0
  %2071 = vmatpush1.msra.mxu0 0.0
  %2072 = vmatprep.subr.mxu0 0.0
  %2073 = vmatpush1.msra.mxu0 0.0
  %2074 = vmatprep.subr.mxu0 0.0
  %2075 = vmatpush1.msra.mxu0 0.0
  %2076 = vmatprep.subr.mxu0 0.0
  %2077 = vmatpush1.msra.mxu0 0.0
  %2078 = vmatprep.subr.mxu0 0.0
  %2079 = vmatpush1.msra.mxu0 0.0
  %2080 = vmatprep.subr.mxu0 0.0
  %2081 = vmatpush1.msra.mxu0 0.0
  %2082 = vmatprep.subr.mxu0 0.0
  %2083 = vmatpush1.msra.mxu0 0.0
  %2084 = vmatprep.subr.mxu0 0.0
  %2085 = vmatpush1.msra.mxu0 0.0
  %2086 = vmatprep.subr.mxu0 0.0
  %2087 = vmatpush1.msra.mxu0 0.0
  %2088 = vmatprep.mubr.f32.mxu0 0.0
  %2089 = vmatmul.mubr.f32.gmra.mrb[0].mxu0 %v2022
  %v2090 = vpop.f32.mrb[0].mxu0
  %v2091 = vadd.f32 %v2020, %v2090
  %v2092 = vpop.f32.mrb[0].mxu0
  %2093 = vdwg.mxu0
  %2094 = vst [vmem:[%s2] sm:$0xff] %v2091
  // Predicated region
  $region10: #{mlp_mixer_forward.1} parent=0 // pred_check
    _
  $region11: #{mlp_mixer_forward.1} parent=0 // pred_check_branch
    %2096 = sbr.rel (0) target = $region13
  $region12: #{mlp_mixer_forward.1} parent=0 // pred_region
    _
  $region13: #{mlp_mixer_forward.1} parent=0 // pred_fallthru
    _
  // Predicated region
  $region14: #{mlp_mixer_forward.1} parent=0 // pred_check
    _
  $region15: #{mlp_mixer_forward.1} parent=0 // pred_check_branch
    %2098 = sbr.rel (0) target = $region17
  $region16: #{mlp_mixer_forward.1} parent=0 // pred_region
    _
  $region17: #{mlp_mixer_forward.1} parent=0 // pred_fallthru
    _

</llo_original>
